<compile_context>
chip_gen: v6e
topology: v6e:2x2x1
jax: 0.10.0
libtpu: 0.0.40
codegen_flags: <defaults>
</compile_context>

<pallas_src>
import functools

import jax
import jax.numpy as jnp
from jax.experimental import pallas as pl
from jax.experimental.pallas import tpu as pltpu


def encoder_layer_kernel(
    x_ref,                                   # (S*B, Dm) flattened activations
    wq_ref, wk_ref, wv_ref,                  # folded projections: (Dm,Dk),(Dm,Dk),(Dm,Dm)
    g1_ref, b1_ref,                          # LayerNorm1 affine, (1, Dm)
    w1_ref, bf1_ref,                         # FFN layer 1: (Dm, Dff), (1, Dff)
    w2_ref, bf2_ref,                         # FFN layer 2: (Dff, Dm), (1, Dm)
    g2_ref, b2_ref,                          # LayerNorm2 affine, (1, Dm)
    o_ref,                                   # (S*B, Dm) output
    *, S, B, eps,
):
    x = x_ref[...].astype(jnp.float32)                                     # (S*B, Dm)
    Dm = x.shape[-1]
    Dk = wq_ref.shape[-1]

    # --- folded q/k/v projections (1/sqrt(dim_model) folded into wq) ---
    q = jnp.dot(x, wq_ref[...], preferred_element_type=jnp.float32)       # (S*B, Dk)
    k = jnp.dot(x, wk_ref[...], preferred_element_type=jnp.float32)       # (S*B, Dk)
    v = jnp.dot(x, wv_ref[...], preferred_element_type=jnp.float32)       # (S*B, Dm)

    q3 = q.reshape(S, B, Dk)
    k3 = k.reshape(S, B, Dk)
    v3 = v.reshape(S, B, Dm)

    # --- scaled dot-product attention over the batch axis, batched over seq ---
    scores = jnp.einsum("sbd,scd->sbc", q3, k3,
                        preferred_element_type=jnp.float32)               # (S, B, B)
    m = jnp.max(scores, axis=-1, keepdims=True)
    p = jnp.exp(scores - m)
    l = jnp.sum(p, axis=-1, keepdims=True)
    attn = p * pl.reciprocal(l, approx=True)
    attn_out = jnp.einsum("sbc,scd->sbd", attn, v3,
                          preferred_element_type=jnp.float32)             # (S, B, Dm)
    attn_out = attn_out.reshape(S * B, Dm)

    # --- residual (dropout1 = identity in eval) + LayerNorm1 ---
    h = x + attn_out
    mu = jnp.mean(h, axis=-1, keepdims=True)
    var = jnp.mean((h - mu) ** 2, axis=-1, keepdims=True)
    h = (h - mu) * jax.lax.rsqrt(var + eps) * g1_ref[...] + b1_ref[...]

    # --- feed-forward: Linear -> ReLU -> Linear ---
    f = jnp.dot(h, w1_ref[...], preferred_element_type=jnp.float32) + bf1_ref[...]
    f = jnp.maximum(f, 0.0)
    f = jnp.dot(f, w2_ref[...], preferred_element_type=jnp.float32) + bf2_ref[...]

    # --- residual (dropout2 = identity) + LayerNorm2 ---
    h = h + f
    mu = jnp.mean(h, axis=-1, keepdims=True)
    var = jnp.mean((h - mu) ** 2, axis=-1, keepdims=True)
    out = (h - mu) * jax.lax.rsqrt(var + eps) * g2_ref[...] + b2_ref[...]

    o_ref[...] = out.astype(o_ref.dtype)


def transformer_encoder_layer(x, params, *, eps=1e-5):
    S, B, Dm = x.shape

    hp = jax.lax.Precision.HIGHEST
    inv_sqrt_dm = 1.0 / jnp.sqrt(jnp.float32(Dm))
    # Fold the two back-to-back linears:  (x @ whq.T) @ wq.T == x @ (wq @ whq).T
    wq_f = jnp.dot(params["wq"], params["whq"], precision=hp).T * inv_sqrt_dm  # (Dm, Dk)
    wk_f = jnp.dot(params["wk"], params["whk"], precision=hp).T                # (Dm, Dk)
    wv_f = jnp.dot(params["wv"], params["whv"], precision=hp).T                # (Dm, Dm)
    w1_t = params["w1"].T                                                      # (Dm, Dff)
    w2_t = params["w2"].T                                                      # (Dff, Dm)

    kernel = functools.partial(encoder_layer_kernel, S=S, B=B, eps=eps)

    vmem = pl.BlockSpec(memory_space=pltpu.MemorySpace.VMEM)

    out2d = pl.pallas_call(
        kernel,
        out_shape=jax.ShapeDtypeStruct((S * B, Dm), x.dtype),
        in_specs=[vmem] * 12,
        out_specs=vmem,
    )(
        x.reshape(S * B, Dm),                 # free layout plumbing in the wrapper
        wq_f, wk_f, wv_f,
        params["g1"], params["b1"],
        w1_t, params["bf1"],
        w2_t, params["bf2"],
        params["g2"], params["b2"],
    )
    return out2d.reshape(S, B, Dm)


def reference(x, p, eps=1e-5):
    """Pure-JAX reference with the same (intended, un-folded) semantics."""
    def ln(h, g, b):
        mu = h.mean(-1, keepdims=True)
        var = ((h - mu) ** 2).mean(-1, keepdims=True)
        return (h - mu) / jnp.sqrt(var + eps) * g + b

    Dm = x.shape[-1]
    qh = x @ p["whq"].T
    kh = x @ p["whk"].T
    vh = x @ p["whv"].T
    q = qh @ p["wq"].T
    k = kh @ p["wk"].T
    v = vh @ p["wv"].T
    scores = jnp.einsum("sbd,scd->sbc", q, k) / jnp.sqrt(jnp.float32(Dm))
    attn = jax.nn.softmax(scores, axis=-1)
    out = jnp.einsum("sbc,scd->sbd", attn, v)
    h = ln(x + out, p["g1"], p["b1"])
    f = jnp.maximum(h @ p["w1"].T + p["bf1"], 0.0) @ p["w2"].T + p["bf2"]
    return ln(h + f, p["g2"], p["b2"])


if __name__ == "__main__":
    # small shapes implied by the module: (seq, batch, dim_model)
    S, B, Dm, Dk, Dff = 8, 8, 32, 32, 64      # head_num = 1, dim_key == dim_model
    eps = 1e-5

    key = jax.random.PRNGKey(0)
    ks = jax.random.split(key, 16)

    def lin(k, out_d, in_d):
        bound = 1.0 / jnp.sqrt(jnp.float32(in_d))
        return jax.random.uniform(k, (out_d, in_d), jnp.float32, -bound, bound)

    params = {
        # multi_head_attention head-0 projections
        "whq": lin(ks[0], Dk, Dm),
        "whk": lin(ks[1], Dk, Dm),
        "whv": lin(ks[2], Dm, Dm),
        # inner dot_product_attention projections
        "wq": lin(ks[3], Dk, Dm),
        "wk": lin(ks[4], Dk, Dm),
        "wv": lin(ks[5], Dm, Dm),
        # LayerNorm affine params
        "g1": 1.0 + 0.1 * jax.random.normal(ks[6], (1, Dm), jnp.float32),
        "b1": 0.1 * jax.random.normal(ks[7], (1, Dm), jnp.float32),
        "g2": 1.0 + 0.1 * jax.random.normal(ks[8], (1, Dm), jnp.float32),
        "b2": 0.1 * jax.random.normal(ks[9], (1, Dm), jnp.float32),
        # feed-forward
        "w1": lin(ks[10], Dff, Dm),
        "bf1": 0.1 * jax.random.normal(ks[11], (1, Dff), jnp.float32),
        "w2": lin(ks[12], Dm, Dff),
        "bf2": 0.1 * jax.random.normal(ks[13], (1, Dm), jnp.float32),
    }

    x = jax.random.normal(ks[14], (S, B, Dm), jnp.float32)

    out = transformer_encoder_layer(x, params, eps=eps)
    jax.block_until_ready(out)

    with jax.default_matmul_precision("float32"):
        ref = reference(x, params, eps=eps)
    assert out.shape == (S, B, Dm)
    # slightly looser tolerance: weight folding + approx reciprocal shift f32 rounding
    assert jnp.allclose(out, ref, atol=5e-3, rtol=5e-3), (
        float(jnp.max(jnp.abs(out - ref)))
    )
    print("KERNEL_OK")
</pallas_src>

<mosaic_0001>
module attributes {stable_mosaic.version = 11 : i64} {
  func.func @encoder_layer_kernel(%arg0: memref<64x32xf32, #tpu.memory_space<vmem>>, %arg1: memref<32x32xf32, #tpu.memory_space<vmem>>, %arg2: memref<32x32xf32, #tpu.memory_space<vmem>>, %arg3: memref<32x32xf32, #tpu.memory_space<vmem>>, %arg4: memref<1x32xf32, #tpu.memory_space<vmem>>, %arg5: memref<1x32xf32, #tpu.memory_space<vmem>>, %arg6: memref<32x64xf32, #tpu.memory_space<vmem>>, %arg7: memref<1x64xf32, #tpu.memory_space<vmem>>, %arg8: memref<64x32xf32, #tpu.memory_space<vmem>>, %arg9: memref<1x32xf32, #tpu.memory_space<vmem>>, %arg10: memref<1x32xf32, #tpu.memory_space<vmem>>, %arg11: memref<1x32xf32, #tpu.memory_space<vmem>>, %arg12: memref<64x32xf32, #tpu.memory_space<vmem>>) attributes {dimension_semantics = [], scalar_prefetch = 0 : i64, scratch_operands = 0 : i64, tpu.core_type = #tpu.core_type<tc>} {
    %c0 = arith.constant 0 : index
    %c0_0 = arith.constant 0 : index
    %0 = vector.load %arg0[%c0, %c0_0] : memref<64x32xf32, #tpu.memory_space<vmem>>, vector<64x32xf32>
    %c0_1 = arith.constant 0 : index
    %c0_2 = arith.constant 0 : index
    %1 = vector.load %arg1[%c0_1, %c0_2] : memref<32x32xf32, #tpu.memory_space<vmem>>, vector<32x32xf32>
    %cst = arith.constant dense<0.000000e+00> : vector<64x32xf32>
    %2 = tpu.matmul %0, %1, %cst {dimension_numbers = #tpu.dot_dimension_numbers<[1], [0], [0], [1], [0, 0, 1, 1], [], []>} : vector<64x32xf32>, vector<32x32xf32>, vector<64x32xf32> -> vector<64x32xf32>
    %c0_3 = arith.constant 0 : index
    %c0_4 = arith.constant 0 : index
    %3 = vector.load %arg2[%c0_3, %c0_4] : memref<32x32xf32, #tpu.memory_space<vmem>>, vector<32x32xf32>
    %cst_5 = arith.constant dense<0.000000e+00> : vector<64x32xf32>
    %4 = tpu.matmul %0, %3, %cst_5 {dimension_numbers = #tpu.dot_dimension_numbers<[1], [0], [0], [1], [0, 0, 1, 1], [], []>} : vector<64x32xf32>, vector<32x32xf32>, vector<64x32xf32> -> vector<64x32xf32>
    %c0_6 = arith.constant 0 : index
    %c0_7 = arith.constant 0 : index
    %5 = vector.load %arg3[%c0_6, %c0_7] : memref<32x32xf32, #tpu.memory_space<vmem>>, vector<32x32xf32>
    %cst_8 = arith.constant dense<0.000000e+00> : vector<64x32xf32>
    %6 = tpu.matmul %0, %5, %cst_8 {dimension_numbers = #tpu.dot_dimension_numbers<[1], [0], [0], [1], [0, 0, 1, 1], [], []>} : vector<64x32xf32>, vector<32x32xf32>, vector<64x32xf32> -> vector<64x32xf32>
    %7 = vector.shape_cast %2 : vector<64x32xf32> to vector<8x8x32xf32>
    %8 = vector.shape_cast %4 : vector<64x32xf32> to vector<8x8x32xf32>
    %9 = vector.shape_cast %6 : vector<64x32xf32> to vector<8x8x32xf32>
    "tpu.trace_start"() <{level = 10 : i32, message = "sbd,scd->sbc"}> : () -> ()
    %cst_9 = arith.constant dense<0.000000e+00> : vector<8x8x8xf32>
    %10 = tpu.matmul %7, %8, %cst_9 {dimension_numbers = #tpu.dot_dimension_numbers<[2], [2], [1], [1], [0, 0, 0, 1, 1, 1], [0], [0]>} : vector<8x8x32xf32>, vector<8x8x32xf32>, vector<8x8x8xf32> -> vector<8x8x8xf32>
    "tpu.trace_stop"() : () -> ()
    %cst_10 = arith.constant dense<0xFF800000> : vector<8x8xf32>
    %11 = vector.multi_reduction <maximumf>, %10, %cst_10 [2] : vector<8x8x8xf32> to vector<8x8xf32>
    %12 = vector.shape_cast %11 : vector<8x8xf32> to vector<8x8x1xf32>
    %13 = vector.broadcast %12 : vector<8x8x1xf32> to vector<8x8x8xf32>
    %14 = arith.subf %10, %13 : vector<8x8x8xf32>
    %15 = math.exp %14 : vector<8x8x8xf32>
    %cst_11 = arith.constant dense<0.000000e+00> : vector<8x8xf32>
    %16 = vector.multi_reduction <add>, %15, %cst_11 [2] : vector<8x8x8xf32> to vector<8x8xf32>
    %17 = vector.shape_cast %16 : vector<8x8xf32> to vector<8x8x1xf32>
    %18 = tpu.reciprocal %17 {approx = true} : vector<8x8x1xf32> -> vector<8x8x1xf32>
    %19 = vector.broadcast %18 : vector<8x8x1xf32> to vector<8x8x8xf32>
    %20 = arith.mulf %15, %19 : vector<8x8x8xf32>
    "tpu.trace_start"() <{level = 10 : i32, message = "sbc,scd->sbd"}> : () -> ()
    %cst_12 = arith.constant dense<0.000000e+00> : vector<8x8x32xf32>
    %21 = tpu.matmul %20, %9, %cst_12 {dimension_numbers = #tpu.dot_dimension_numbers<[2], [1], [1], [2], [0, 0, 0, 1, 1, 2], [0], [0]>} : vector<8x8x8xf32>, vector<8x8x32xf32>, vector<8x8x32xf32> -> vector<8x8x32xf32>
    "tpu.trace_stop"() : () -> ()
    %22 = vector.shape_cast %21 : vector<8x8x32xf32> to vector<64x32xf32>
    %23 = arith.addf %0, %22 : vector<64x32xf32>
    %cst_13 = arith.constant dense<0.000000e+00> : vector<64xf32>
    %24 = vector.multi_reduction <add>, %23, %cst_13 [1] : vector<64x32xf32> to vector<64xf32>
    %25 = vector.shape_cast %24 : vector<64xf32> to vector<64x1xf32>
    %cst_14 = arith.constant 3.200000e+01 : f32
    %26 = vector.broadcast %cst_14 : f32 to vector<64x1xf32>
    %27 = arith.divf %25, %26 : vector<64x1xf32>
    %28 = vector.broadcast %27 : vector<64x1xf32> to vector<64x32xf32>
    %29 = arith.subf %23, %28 : vector<64x32xf32>
    %30 = arith.mulf %29, %29 : vector<64x32xf32>
    %cst_15 = arith.constant dense<0.000000e+00> : vector<64xf32>
    %31 = vector.multi_reduction <add>, %30, %cst_15 [1] : vector<64x32xf32> to vector<64xf32>
    %32 = vector.shape_cast %31 : vector<64xf32> to vector<64x1xf32>
    %cst_16 = arith.constant 3.200000e+01 : f32
    %33 = vector.broadcast %cst_16 : f32 to vector<64x1xf32>
    %34 = arith.divf %32, %33 : vector<64x1xf32>
    %35 = vector.broadcast %27 : vector<64x1xf32> to vector<64x32xf32>
    %36 = arith.subf %23, %35 : vector<64x32xf32>
    %cst_17 = arith.constant 9.99999974E-6 : f32
    %37 = vector.broadcast %cst_17 : f32 to vector<64x1xf32>
    %38 = arith.addf %34, %37 : vector<64x1xf32>
    %39 = math.rsqrt %38 : vector<64x1xf32>
    %40 = vector.broadcast %39 : vector<64x1xf32> to vector<64x32xf32>
    %41 = arith.mulf %36, %40 : vector<64x32xf32>
    %c0_18 = arith.constant 0 : index
    %c0_19 = arith.constant 0 : index
    %42 = vector.load %arg4[%c0_18, %c0_19] : memref<1x32xf32, #tpu.memory_space<vmem>>, vector<1x32xf32>
    %43 = vector.broadcast %42 : vector<1x32xf32> to vector<64x32xf32>
    %44 = arith.mulf %41, %43 : vector<64x32xf32>
    %c0_20 = arith.constant 0 : index
    %c0_21 = arith.constant 0 : index
    %45 = vector.load %arg5[%c0_20, %c0_21] : memref<1x32xf32, #tpu.memory_space<vmem>>, vector<1x32xf32>
    %46 = vector.broadcast %45 : vector<1x32xf32> to vector<64x32xf32>
    %47 = arith.addf %44, %46 : vector<64x32xf32>
    %c0_22 = arith.constant 0 : index
    %c0_23 = arith.constant 0 : index
    %48 = vector.load %arg6[%c0_22, %c0_23] : memref<32x64xf32, #tpu.memory_space<vmem>>, vector<32x64xf32>
    %cst_24 = arith.constant dense<0.000000e+00> : vector<64x64xf32>
    %49 = tpu.matmul %47, %48, %cst_24 {dimension_numbers = #tpu.dot_dimension_numbers<[1], [0], [0], [1], [0, 0, 1, 1], [], []>} : vector<64x32xf32>, vector<32x64xf32>, vector<64x64xf32> -> vector<64x64xf32>
    %c0_25 = arith.constant 0 : index
    %c0_26 = arith.constant 0 : index
    %50 = vector.load %arg7[%c0_25, %c0_26] : memref<1x64xf32, #tpu.memory_space<vmem>>, vector<1x64xf32>
    %51 = vector.broadcast %50 : vector<1x64xf32> to vector<64x64xf32>
    %52 = arith.addf %49, %51 : vector<64x64xf32>
    %cst_27 = arith.constant 0.000000e+00 : f32
    %53 = vector.broadcast %cst_27 : f32 to vector<64x64xf32>
    %54 = arith.maximumf %52, %53 : vector<64x64xf32>
    %c0_28 = arith.constant 0 : index
    %c0_29 = arith.constant 0 : index
    %55 = vector.load %arg8[%c0_28, %c0_29] : memref<64x32xf32, #tpu.memory_space<vmem>>, vector<64x32xf32>
    %cst_30 = arith.constant dense<0.000000e+00> : vector<64x32xf32>
    %56 = tpu.matmul %54, %55, %cst_30 {dimension_numbers = #tpu.dot_dimension_numbers<[1], [0], [0], [1], [0, 0, 1, 1], [], []>} : vector<64x64xf32>, vector<64x32xf32>, vector<64x32xf32> -> vector<64x32xf32>
    %c0_31 = arith.constant 0 : index
    %c0_32 = arith.constant 0 : index
    %57 = vector.load %arg9[%c0_31, %c0_32] : memref<1x32xf32, #tpu.memory_space<vmem>>, vector<1x32xf32>
    %58 = vector.broadcast %57 : vector<1x32xf32> to vector<64x32xf32>
    %59 = arith.addf %56, %58 : vector<64x32xf32>
    %60 = arith.addf %47, %59 : vector<64x32xf32>
    %cst_33 = arith.constant dense<0.000000e+00> : vector<64xf32>
    %61 = vector.multi_reduction <add>, %60, %cst_33 [1] : vector<64x32xf32> to vector<64xf32>
    %62 = vector.shape_cast %61 : vector<64xf32> to vector<64x1xf32>
    %cst_34 = arith.constant 3.200000e+01 : f32
    %63 = vector.broadcast %cst_34 : f32 to vector<64x1xf32>
    %64 = arith.divf %62, %63 : vector<64x1xf32>
    %65 = vector.broadcast %64 : vector<64x1xf32> to vector<64x32xf32>
    %66 = arith.subf %60, %65 : vector<64x32xf32>
    %67 = arith.mulf %66, %66 : vector<64x32xf32>
    %cst_35 = arith.constant dense<0.000000e+00> : vector<64xf32>
    %68 = vector.multi_reduction <add>, %67, %cst_35 [1] : vector<64x32xf32> to vector<64xf32>
    %69 = vector.shape_cast %68 : vector<64xf32> to vector<64x1xf32>
    %cst_36 = arith.constant 3.200000e+01 : f32
    %70 = vector.broadcast %cst_36 : f32 to vector<64x1xf32>
    %71 = arith.divf %69, %70 : vector<64x1xf32>
    %72 = vector.broadcast %64 : vector<64x1xf32> to vector<64x32xf32>
    %73 = arith.subf %60, %72 : vector<64x32xf32>
    %cst_37 = arith.constant 9.99999974E-6 : f32
    %74 = vector.broadcast %cst_37 : f32 to vector<64x1xf32>
    %75 = arith.addf %71, %74 : vector<64x1xf32>
    %76 = math.rsqrt %75 : vector<64x1xf32>
    %77 = vector.broadcast %76 : vector<64x1xf32> to vector<64x32xf32>
    %78 = arith.mulf %73, %77 : vector<64x32xf32>
    %c0_38 = arith.constant 0 : index
    %c0_39 = arith.constant 0 : index
    %79 = vector.load %arg10[%c0_38, %c0_39] : memref<1x32xf32, #tpu.memory_space<vmem>>, vector<1x32xf32>
    %80 = vector.broadcast %79 : vector<1x32xf32> to vector<64x32xf32>
    %81 = arith.mulf %78, %80 : vector<64x32xf32>
    %c0_40 = arith.constant 0 : index
    %c0_41 = arith.constant 0 : index
    %82 = vector.load %arg11[%c0_40, %c0_41] : memref<1x32xf32, #tpu.memory_space<vmem>>, vector<1x32xf32>
    %83 = vector.broadcast %82 : vector<1x32xf32> to vector<64x32xf32>
    %84 = arith.addf %81, %83 : vector<64x32xf32>
    %c0_42 = arith.constant 0 : index
    %c0_43 = arith.constant 0 : index
    %85 = vector.load %arg12[%c0_42, %c0_43] : memref<64x32xf32, #tpu.memory_space<vmem>>, vector<64x32xf32>
    tpu.vector_store %arg12[%c0_42, %c0_43], %84 {strides = array<i32>} : memref<64x32xf32, #tpu.memory_space<vmem>>, vector<64x32xf32>,
    return
  }
}

</mosaic_0001>

<llo_original>
// kernel: tpu_custom_call.1
$region0: #{tpu_custom_call.1}
  #allocation0 [shape = 'u32[]', space=smem, size = 0x4, offset = 0x4, fixed_abs, tag = 'smem constant byte address 0x4 - core index']
  #allocation1 [shape = 'u32[144,128]{1,0:T(1,128)}', space=vmem, size = 0x12000, scoped, tag = 'internal scratch']
  %s0 = inlined_call_operand.vmem [shape: f32[64,32], index: 0, kind: input, shape index: {}]
  %s1 = inlined_call_operand.vmem [shape: f32[32,32], index: 1, kind: input, shape index: {}]
  %s2 = inlined_call_operand.vmem [shape: f32[32,32], index: 2, kind: input, shape index: {}]
  %s3 = inlined_call_operand.vmem [shape: f32[32,32], index: 3, kind: input, shape index: {}]
  %s4 = inlined_call_operand.vmem [shape: f32[1,32], index: 4, kind: input, shape index: {}]
  %s5 = inlined_call_operand.vmem [shape: f32[1,32], index: 5, kind: input, shape index: {}]
  %s6 = inlined_call_operand.vmem [shape: f32[32,64], index: 6, kind: input, shape index: {}]
  %s7 = inlined_call_operand.vmem [shape: f32[1,64], index: 7, kind: input, shape index: {}]
  %s8 = inlined_call_operand.vmem [shape: f32[64,32], index: 8, kind: input, shape index: {}]
  %s9 = inlined_call_operand.vmem [shape: f32[1,32], index: 9, kind: input, shape index: {}]
  %s10 = inlined_call_operand.vmem [shape: f32[1,32], index: 10, kind: input, shape index: {}]
  %s11 = inlined_call_operand.vmem [shape: f32[1,32], index: 11, kind: input, shape index: {}]
  %s12 = inlined_call_operand.vmem [shape: f32[64,32], index: 12, kind: output, shape index: {}]
  %s13 = sld [smem:[#allocation0]]
  $region58: #{tpu_custom_call.1} parent=0
    _
  %s15 = ssub.s32 1, %s13
  %s16 = scalar_select 0, %s15, %s13
  // Predicated region
  $region2: #{tpu_custom_call.1} parent=0 // pred_check
    _
  $region3: #{tpu_custom_call.1} parent=0 // pred_check_branch
    %18 = sbr.rel (0) target = $region5
  $region4: #{tpu_custom_call.1} parent=0 // pred_region
    _
  $region5: #{tpu_custom_call.1} parent=0 // pred_fallthru
    _
  // Predicated region
  $region6: #{tpu_custom_call.1} parent=0 // pred_check
    _
  $region7: #{tpu_custom_call.1} parent=0 // pred_check_branch
    %20 = sbr.rel (0) target = $region9
  $region8: #{tpu_custom_call.1} parent=0 // pred_region
    _
  $region9: #{tpu_custom_call.1} parent=0 // pred_fallthru
    _
  // Predicated region
  $region10: #{tpu_custom_call.1} parent=0 // pred_check
    _
  $region11: #{tpu_custom_call.1} parent=0 // pred_check_branch
    %22 = sbr.rel (0) target = $region13
  $region12: #{tpu_custom_call.1} parent=0 // pred_region
    _
  $region13: #{tpu_custom_call.1} parent=0 // pred_fallthru
    _
  // Predicated region
  $region14: #{tpu_custom_call.1} parent=0 // pred_check
    _
  $region15: #{tpu_custom_call.1} parent=0 // pred_check_branch
    %24 = sbr.rel (0) target = $region17
  $region16: #{tpu_custom_call.1} parent=0 // pred_region
    _
  $region17: #{tpu_custom_call.1} parent=0 // pred_fallthru
    _
  // Predicated region
  $region18: #{tpu_custom_call.1} parent=0 // pred_check
    _
  $region19: #{tpu_custom_call.1} parent=0 // pred_check_branch
    %26 = sbr.rel (0) target = $region21
  $region20: #{tpu_custom_call.1} parent=0 // pred_region
    _
  $region21: #{tpu_custom_call.1} parent=0 // pred_fallthru
    _
  // Predicated region
  $region22: #{tpu_custom_call.1} parent=0 // pred_check
    _
  $region23: #{tpu_custom_call.1} parent=0 // pred_check_branch
    %28 = sbr.rel (0) target = $region25
  $region24: #{tpu_custom_call.1} parent=0 // pred_region
    _
  $region25: #{tpu_custom_call.1} parent=0 // pred_fallthru
    _
  // Predicated region
  $region26: #{tpu_custom_call.1} parent=0 // pred_check
    _
  $region27: #{tpu_custom_call.1} parent=0 // pred_check_branch
    %30 = sbr.rel (0) target = $region29
  $region28: #{tpu_custom_call.1} parent=0 // pred_region
    _
  $region29: #{tpu_custom_call.1} parent=0 // pred_fallthru
    _
  // Predicated region
  $region30: #{tpu_custom_call.1} parent=0 // pred_check
    _
  $region31: #{tpu_custom_call.1} parent=0 // pred_check_branch
    %32 = sbr.rel (0) target = $region33
  $region32: #{tpu_custom_call.1} parent=0 // pred_region
    _
  $region33: #{tpu_custom_call.1} parent=0 // pred_fallthru
    _
  // Predicated region
  $region34: #{tpu_custom_call.1} parent=0 // pred_check
    _
  $region35: #{tpu_custom_call.1} parent=0 // pred_check_branch
    %34 = sbr.rel (0) target = $region37
  $region36: #{tpu_custom_call.1} parent=0 // pred_region
    _
  $region37: #{tpu_custom_call.1} parent=0 // pred_fallthru
    _
  // Predicated region
  $region38: #{tpu_custom_call.1} parent=0 // pred_check
    _
  $region39: #{tpu_custom_call.1} parent=0 // pred_check_branch
    %36 = sbr.rel (0) target = $region41
  $region40: #{tpu_custom_call.1} parent=0 // pred_region
    _
  $region41: #{tpu_custom_call.1} parent=0 // pred_fallthru
    _
  // Predicated region
  $region42: #{tpu_custom_call.1} parent=0 // pred_check
    _
  $region43: #{tpu_custom_call.1} parent=0 // pred_check_branch
    %38 = sbr.rel (0) target = $region45
  $region44: #{tpu_custom_call.1} parent=0 // pred_region
    _
  $region45: #{tpu_custom_call.1} parent=0 // pred_fallthru
    _
  // Predicated region
  $region46: #{tpu_custom_call.1} parent=0 // pred_check
    _
  $region47: #{tpu_custom_call.1} parent=0 // pred_check_branch
    %40 = sbr.rel (0) target = $region49
  $region48: #{tpu_custom_call.1} parent=0 // pred_region
    _
  $region49: #{tpu_custom_call.1} parent=0 // pred_fallthru
    _
  %v41 = vld [vmem:[%s0] sm:$0xff]
  %v42 = vld [vmem:[%s0 + $0x8] sm:$0xff]
  %v43 = vld [vmem:[%s0 + $0x10] sm:$0xff]
  %v44 = vld [vmem:[%s0 + $0x18] sm:$0xff]
  %v45 = vld [vmem:[%s0 + $0x20] sm:$0xff]
  %v46 = vld [vmem:[%s0 + $0x28] sm:$0xff]
  %v47 = vld [vmem:[%s0 + $0x30] sm:$0xff]
  %v48 = vld [vmem:[%s0 + $0x38] sm:$0xff]
  %v49 = vld [vmem:[%s1] sm:$0xff]
  %v50 = vld [vmem:[%s1 + $0x8] sm:$0xff]
  %v51 = vld [vmem:[%s1 + $0x10] sm:$0xff]
  %v52 = vld [vmem:[%s1 + $0x18] sm:$0xff]
  %vm53 = vcmask 261120
  %v55 = vsel %vm53, %v41, 0
  %v58 = vsel %vm53, %v42, 0
  %v61 = vsel %vm53, %v43, 0
  %v64 = vsel %vm53, %v44, 0
  %v67 = vsel %vm53, %v45, 0
  %v70 = vsel %vm53, %v46, 0
  %v73 = vsel %vm53, %v47, 0
  %v76 = vsel %vm53, %v48, 0
  %78 = vmatprep.subr.mxu0 0.0
  %79 = vmatpush1.msra.mxu0 0.0
  %80 = vmatprep.subr.mxu0 0.0
  %81 = vmatpush1.msra.mxu0 0.0
  %82 = vmatprep.subr.mxu0 0.0
  %83 = vmatpush1.msra.mxu0 0.0
  %84 = vmatprep.subr.mxu0 0.0
  %85 = vmatpush1.msra.mxu0 0.0
  %86 = vmatprep.subr.mxu0 0.0
  %87 = vmatpush1.msra.mxu0 0.0
  %88 = vmatprep.subr.mxu0 0.0
  %89 = vmatpush1.msra.mxu0 0.0
  %90 = vmatprep.subr.mxu0 0.0
  %91 = vmatpush1.msra.mxu0 0.0
  %92 = vmatprep.subr.mxu0 0.0
  %93 = vmatpush1.msra.mxu0 0.0
  %94 = vmatprep.subr.mxu0 0.0
  %95 = vmatpush1.msra.mxu0 0.0
  %96 = vmatprep.subr.mxu0 0.0
  %97 = vmatpush1.msra.mxu0 0.0
  %98 = vmatprep.subr.mxu0 0.0
  %99 = vmatpush1.msra.mxu0 0.0
  %100 = vmatprep.subr.mxu0 0.0
  %101 = vmatpush1.msra.mxu0 0.0
  %102 = vmatprep.subr.mxu0 0.0
  %103 = vmatpush1.msra.mxu0 %v52
  %104 = vmatprep.subr.mxu0 0.0
  %105 = vmatpush1.msra.mxu0 %v51
  %106 = vmatprep.subr.mxu0 0.0
  %107 = vmatpush1.msra.mxu0 %v50
  %108 = vmatprep.subr.mxu0 0.0
  %109 = vmatpush1.msra.mxu0 %v49
  %110 = vmatprep.subr.mxu0 0.0
  %111 = vmatpush2.msra.mxu0 0.0
  %112 = vmatprep.subr.mxu0 0.0
  %113 = vmatpush2.msra.mxu0 0.0
  %114 = vmatprep.subr.mxu0 0.0
  %115 = vmatpush2.msra.mxu0 0.0
  %116 = vmatprep.subr.mxu0 0.0
  %117 = vmatpush2.msra.mxu0 0.0
  %118 = vmatprep.subr.mxu0 0.0
  %119 = vmatpush2.msra.mxu0 0.0
  %120 = vmatprep.subr.mxu0 0.0
  %121 = vmatpush2.msra.mxu0 0.0
  %122 = vmatprep.subr.mxu0 0.0
  %123 = vmatpush2.msra.mxu0 0.0
  %124 = vmatprep.subr.mxu0 0.0
  %125 = vmatpush2.msra.mxu0 0.0
  %126 = vmatprep.subr.mxu0 0.0
  %127 = vmatpush2.msra.mxu0 0.0
  %128 = vmatprep.subr.mxu0 0.0
  %129 = vmatpush2.msra.mxu0 0.0
  %130 = vmatprep.subr.mxu0 0.0
  %131 = vmatpush2.msra.mxu0 0.0
  %132 = vmatprep.subr.mxu0 0.0
  %133 = vmatpush2.msra.mxu0 0.0
  %134 = vmatprep.subr.mxu0 0.0
  %135 = vmatpush2.msra.mxu0 0.0
  %136 = vmatprep.subr.mxu0 0.0
  %137 = vmatpush2.msra.mxu0 0.0
  %138 = vmatprep.subr.mxu0 0.0
  %139 = vmatpush2.msra.mxu0 0.0
  %140 = vmatprep.subr.mxu0 0.0
  %141 = vmatpush2.msra.mxu0 0.0
  %142 = vmatprep.mubr.f32.mxu0 0.0
  %143 = vmatmul.mubr.f32.gmra.mxu0 %v55
  %v144 = vpop.f32.mrf.mxu0
  %v145 = vadd.f32 0.0, %v144
  %v146 = vpop.f32.mrf.mxu0
  %147 = vmatprep.mubr.f32.mxu0 0.0
  %148 = vmatmul.mubr.f32.gmra.mxu0 %v58
  %v149 = vpop.f32.mrf.mxu0
  %v150 = vadd.f32 0.0, %v149
  %v151 = vpop.f32.mrf.mxu0
  %152 = vmatprep.mubr.f32.mxu0 0.0
  %153 = vmatmul.mubr.f32.gmra.mxu0 %v61
  %v154 = vpop.f32.mrf.mxu0
  %v155 = vadd.f32 0.0, %v154
  %v156 = vpop.f32.mrf.mxu0
  %157 = vmatprep.mubr.f32.mxu0 0.0
  %158 = vmatmul.mubr.f32.gmra.mxu0 %v64
  %v159 = vpop.f32.mrf.mxu0
  %v160 = vadd.f32 0.0, %v159
  %v161 = vpop.f32.mrf.mxu0
  %162 = vmatprep.mubr.f32.mxu0 0.0
  %163 = vmatmul.mubr.f32.gmra.mxu0 %v67
  %v164 = vpop.f32.mrf.mxu0
  %v165 = vadd.f32 0.0, %v164
  %v166 = vpop.f32.mrf.mxu0
  %167 = vmatprep.mubr.f32.mxu0 0.0
  %168 = vmatmul.mubr.f32.gmra.mxu0 %v70
  %v169 = vpop.f32.mrf.mxu0
  %v170 = vadd.f32 0.0, %v169
  %v171 = vpop.f32.mrf.mxu0
  %172 = vmatprep.mubr.f32.mxu0 0.0
  %173 = vmatmul.mubr.f32.gmra.mxu0 %v73
  %v174 = vpop.f32.mrf.mxu0
  %v175 = vadd.f32 0.0, %v174
  %v176 = vpop.f32.mrf.mxu0
  %177 = vmatprep.mubr.f32.mxu0 0.0
  %178 = vmatmul.mubr.f32.gmra.mxu0 %v76
  %v179 = vpop.f32.mrf.mxu0
  %v180 = vadd.f32 0.0, %v179
  %v181 = vpop.f32.mrf.mxu0
  %182 = vdwg.mxu0
  %v183 = vld [vmem:[%s2] sm:$0xff]
  %v184 = vld [vmem:[%s2 + $0x8] sm:$0xff]
  %v185 = vld [vmem:[%s2 + $0x10] sm:$0xff]
  %v186 = vld [vmem:[%s2 + $0x18] sm:$0xff]
  %187 = vmatprep.subr.mxu0 0.0
  %188 = vmatpush1.msra.mxu0 0.0
  %189 = vmatprep.subr.mxu0 0.0
  %190 = vmatpush1.msra.mxu0 0.0
  %191 = vmatprep.subr.mxu0 0.0
  %192 = vmatpush1.msra.mxu0 0.0
  %193 = vmatprep.subr.mxu0 0.0
  %194 = vmatpush1.msra.mxu0 0.0
  %195 = vmatprep.subr.mxu0 0.0
  %196 = vmatpush1.msra.mxu0 0.0
  %197 = vmatprep.subr.mxu0 0.0
  %198 = vmatpush1.msra.mxu0 0.0
  %199 = vmatprep.subr.mxu0 0.0
  %200 = vmatpush1.msra.mxu0 0.0
  %201 = vmatprep.subr.mxu0 0.0
  %202 = vmatpush1.msra.mxu0 0.0
  %203 = vmatprep.subr.mxu0 0.0
  %204 = vmatpush1.msra.mxu0 0.0
  %205 = vmatprep.subr.mxu0 0.0
  %206 = vmatpush1.msra.mxu0 0.0
  %207 = vmatprep.subr.mxu0 0.0
  %208 = vmatpush1.msra.mxu0 0.0
  %209 = vmatprep.subr.mxu0 0.0
  %210 = vmatpush1.msra.mxu0 0.0
  %211 = vmatprep.subr.mxu0 0.0
  %212 = vmatpush1.msra.mxu0 %v186
  %213 = vmatprep.subr.mxu0 0.0
  %214 = vmatpush1.msra.mxu0 %v185
  %215 = vmatprep.subr.mxu0 0.0
  %216 = vmatpush1.msra.mxu0 %v184
  %217 = vmatprep.subr.mxu0 0.0
  %218 = vmatpush1.msra.mxu0 %v183
  %219 = vmatprep.subr.mxu0 0.0
  %220 = vmatpush2.msra.mxu0 0.0
  %221 = vmatprep.subr.mxu0 0.0
  %222 = vmatpush2.msra.mxu0 0.0
  %223 = vmatprep.subr.mxu0 0.0
  %224 = vmatpush2.msra.mxu0 0.0
  %225 = vmatprep.subr.mxu0 0.0
  %226 = vmatpush2.msra.mxu0 0.0
  %227 = vmatprep.subr.mxu0 0.0
  %228 = vmatpush2.msra.mxu0 0.0
  %229 = vmatprep.subr.mxu0 0.0
  %230 = vmatpush2.msra.mxu0 0.0
  %231 = vmatprep.subr.mxu0 0.0
  %232 = vmatpush2.msra.mxu0 0.0
  %233 = vmatprep.subr.mxu0 0.0
  %234 = vmatpush2.msra.mxu0 0.0
  %235 = vmatprep.subr.mxu0 0.0
  %236 = vmatpush2.msra.mxu0 0.0
  %237 = vmatprep.subr.mxu0 0.0
  %238 = vmatpush2.msra.mxu0 0.0
  %239 = vmatprep.subr.mxu0 0.0
  %240 = vmatpush2.msra.mxu0 0.0
  %241 = vmatprep.subr.mxu0 0.0
  %242 = vmatpush2.msra.mxu0 0.0
  %243 = vmatprep.subr.mxu0 0.0
  %244 = vmatpush2.msra.mxu0 0.0
  %245 = vmatprep.subr.mxu0 0.0
  %246 = vmatpush2.msra.mxu0 0.0
  %247 = vmatprep.subr.mxu0 0.0
  %248 = vmatpush2.msra.mxu0 0.0
  %249 = vmatprep.subr.mxu0 0.0
  %250 = vmatpush2.msra.mxu0 0.0
  %251 = vmatprep.mubr.f32.mxu0 0.0
  %252 = vmatmul.mubr.f32.gmra.mxu0 %v55
  %v253 = vpop.f32.mrf.mxu0
  %v254 = vadd.f32 0.0, %v253
  %v255 = vpop.f32.mrf.mxu0
  %256 = vmatprep.mubr.f32.mxu0 0.0
  %257 = vmatmul.mubr.f32.gmra.mxu0 %v58
  %v258 = vpop.f32.mrf.mxu0
  %v259 = vadd.f32 0.0, %v258
  %v260 = vpop.f32.mrf.mxu0
  %261 = vmatprep.mubr.f32.mxu0 0.0
  %262 = vmatmul.mubr.f32.gmra.mxu0 %v61
  %v263 = vpop.f32.mrf.mxu0
  %v264 = vadd.f32 0.0, %v263
  %v265 = vpop.f32.mrf.mxu0
  %266 = vmatprep.mubr.f32.mxu0 0.0
  %267 = vmatmul.mubr.f32.gmra.mxu0 %v64
  %v268 = vpop.f32.mrf.mxu0
  %v269 = vadd.f32 0.0, %v268
  %v270 = vpop.f32.mrf.mxu0
  %271 = vmatprep.mubr.f32.mxu0 0.0
  %272 = vmatmul.mubr.f32.gmra.mxu0 %v67
  %v273 = vpop.f32.mrf.mxu0
  %v274 = vadd.f32 0.0, %v273
  %v275 = vpop.f32.mrf.mxu0
  %276 = vmatprep.mubr.f32.mxu0 0.0
  %277 = vmatmul.mubr.f32.gmra.mxu0 %v70
  %v278 = vpop.f32.mrf.mxu0
  %v279 = vadd.f32 0.0, %v278
  %v280 = vpop.f32.mrf.mxu0
  %281 = vmatprep.mubr.f32.mxu0 0.0
  %282 = vmatmul.mubr.f32.gmra.mxu0 %v73
  %v283 = vpop.f32.mrf.mxu0
  %v284 = vadd.f32 0.0, %v283
  %v285 = vpop.f32.mrf.mxu0
  %286 = vmatprep.mubr.f32.mxu0 0.0
  %287 = vmatmul.mubr.f32.gmra.mxu0 %v76
  %v288 = vpop.f32.mrf.mxu0
  %v289 = vadd.f32 0.0, %v288
  %v290 = vpop.f32.mrf.mxu0
  %291 = vdwg.mxu0
  %v292 = vld [vmem:[%s3] sm:$0xff]
  %v293 = vld [vmem:[%s3 + $0x8] sm:$0xff]
  %v294 = vld [vmem:[%s3 + $0x10] sm:$0xff]
  %v295 = vld [vmem:[%s3 + $0x18] sm:$0xff]
  %296 = vmatprep.subr.mxu0 0.0
  %297 = vmatpush1.msra.mxu0 0.0
  %298 = vmatprep.subr.mxu0 0.0
  %299 = vmatpush1.msra.mxu0 0.0
  %300 = vmatprep.subr.mxu0 0.0
  %301 = vmatpush1.msra.mxu0 0.0
  %302 = vmatprep.subr.mxu0 0.0
  %303 = vmatpush1.msra.mxu0 0.0
  %304 = vmatprep.subr.mxu0 0.0
  %305 = vmatpush1.msra.mxu0 0.0
  %306 = vmatprep.subr.mxu0 0.0
  %307 = vmatpush1.msra.mxu0 0.0
  %308 = vmatprep.subr.mxu0 0.0
  %309 = vmatpush1.msra.mxu0 0.0
  %310 = vmatprep.subr.mxu0 0.0
  %311 = vmatpush1.msra.mxu0 0.0
  %312 = vmatprep.subr.mxu0 0.0
  %313 = vmatpush1.msra.mxu0 0.0
  %314 = vmatprep.subr.mxu0 0.0
  %315 = vmatpush1.msra.mxu0 0.0
  %316 = vmatprep.subr.mxu0 0.0
  %317 = vmatpush1.msra.mxu0 0.0
  %318 = vmatprep.subr.mxu0 0.0
  %319 = vmatpush1.msra.mxu0 0.0
  %320 = vmatprep.subr.mxu0 0.0
  %321 = vmatpush1.msra.mxu0 %v295
  %322 = vmatprep.subr.mxu0 0.0
  %323 = vmatpush1.msra.mxu0 %v294
  %324 = vmatprep.subr.mxu0 0.0
  %325 = vmatpush1.msra.mxu0 %v293
  %326 = vmatprep.subr.mxu0 0.0
  %327 = vmatpush1.msra.mxu0 %v292
  %328 = vmatprep.subr.mxu0 0.0
  %329 = vmatpush2.msra.mxu0 0.0
  %330 = vmatprep.subr.mxu0 0.0
  %331 = vmatpush2.msra.mxu0 0.0
  %332 = vmatprep.subr.mxu0 0.0
  %333 = vmatpush2.msra.mxu0 0.0
  %334 = vmatprep.subr.mxu0 0.0
  %335 = vmatpush2.msra.mxu0 0.0
  %336 = vmatprep.subr.mxu0 0.0
  %337 = vmatpush2.msra.mxu0 0.0
  %338 = vmatprep.subr.mxu0 0.0
  %339 = vmatpush2.msra.mxu0 0.0
  %340 = vmatprep.subr.mxu0 0.0
  %341 = vmatpush2.msra.mxu0 0.0
  %342 = vmatprep.subr.mxu0 0.0
  %343 = vmatpush2.msra.mxu0 0.0
  %344 = vmatprep.subr.mxu0 0.0
  %345 = vmatpush2.msra.mxu0 0.0
  %346 = vmatprep.subr.mxu0 0.0
  %347 = vmatpush2.msra.mxu0 0.0
  %348 = vmatprep.subr.mxu0 0.0
  %349 = vmatpush2.msra.mxu0 0.0
  %350 = vmatprep.subr.mxu0 0.0
  %351 = vmatpush2.msra.mxu0 0.0
  %352 = vmatprep.subr.mxu0 0.0
  %353 = vmatpush2.msra.mxu0 0.0
  %354 = vmatprep.subr.mxu0 0.0
  %355 = vmatpush2.msra.mxu0 0.0
  %356 = vmatprep.subr.mxu0 0.0
  %357 = vmatpush2.msra.mxu0 0.0
  %358 = vmatprep.subr.mxu0 0.0
  %359 = vmatpush2.msra.mxu0 0.0
  %360 = vmatprep.mubr.f32.mxu0 0.0
  %361 = vmatmul.mubr.f32.gmra.mxu0 %v55
  %v362 = vpop.f32.mrf.mxu0
  %v363 = vadd.f32 0.0, %v362
  %v364 = vpop.f32.mrf.mxu0
  %365 = vmatprep.mubr.f32.mxu0 0.0
  %366 = vmatmul.mubr.f32.gmra.mxu0 %v58
  %v367 = vpop.f32.mrf.mxu0
  %v368 = vadd.f32 0.0, %v367
  %v369 = vpop.f32.mrf.mxu0
  %370 = vmatprep.mubr.f32.mxu0 0.0
  %371 = vmatmul.mubr.f32.gmra.mxu0 %v61
  %v372 = vpop.f32.mrf.mxu0
  %v373 = vadd.f32 0.0, %v372
  %v374 = vpop.f32.mrf.mxu0
  %375 = vmatprep.mubr.f32.mxu0 0.0
  %376 = vmatmul.mubr.f32.gmra.mxu0 %v64
  %v377 = vpop.f32.mrf.mxu0
  %v378 = vadd.f32 0.0, %v377
  %v379 = vpop.f32.mrf.mxu0
  %380 = vmatprep.mubr.f32.mxu0 0.0
  %381 = vmatmul.mubr.f32.gmra.mxu0 %v67
  %v382 = vpop.f32.mrf.mxu0
  %v383 = vadd.f32 0.0, %v382
  %v384 = vpop.f32.mrf.mxu0
  %385 = vmatprep.mubr.f32.mxu0 0.0
  %386 = vmatmul.mubr.f32.gmra.mxu0 %v70
  %v387 = vpop.f32.mrf.mxu0
  %v388 = vadd.f32 0.0, %v387
  %v389 = vpop.f32.mrf.mxu0
  %390 = vmatprep.mubr.f32.mxu0 0.0
  %391 = vmatmul.mubr.f32.gmra.mxu0 %v73
  %v392 = vpop.f32.mrf.mxu0
  %v393 = vadd.f32 0.0, %v392
  %v394 = vpop.f32.mrf.mxu0
  %395 = vmatprep.mubr.f32.mxu0 0.0
  %396 = vmatmul.mubr.f32.gmra.mxu0 %v76
  %v397 = vpop.f32.mrf.mxu0
  %v398 = vadd.f32 0.0, %v397
  %v399 = vpop.f32.mrf.mxu0
  %400 = vdwg.mxu0
  %v402 = vsel %vm53, %v145, 0
  %v405 = vsel %vm53, %v254, 0
  %407 = vmatprep.subr.mxu0 0.0
  %408 = vmatpush1.xpose.msra.mxu0 0.0
  %409 = vmatprep.subr.mxu0 0.0
  %410 = vmatpush1.xpose.msra.mxu0 0.0
  %411 = vmatprep.subr.mxu0 0.0
  %412 = vmatpush1.xpose.msra.mxu0 0.0
  %413 = vmatprep.subr.mxu0 0.0
  %414 = vmatpush1.xpose.msra.mxu0 0.0
  %415 = vmatprep.subr.mxu0 0.0
  %416 = vmatpush1.xpose.msra.mxu0 0.0
  %417 = vmatprep.subr.mxu0 0.0
  %418 = vmatpush1.xpose.msra.mxu0 0.0
  %419 = vmatprep.subr.mxu0 0.0
  %420 = vmatpush1.xpose.msra.mxu0 0.0
  %421 = vmatprep.subr.mxu0 0.0
  %422 = vmatpush1.xpose.msra.mxu0 0.0
  %423 = vmatprep.subr.mxu0 0.0
  %424 = vmatpush1.xpose.msra.mxu0 0.0
  %425 = vmatprep.subr.mxu0 0.0
  %426 = vmatpush1.xpose.msra.mxu0 0.0
  %427 = vmatprep.subr.mxu0 0.0
  %428 = vmatpush1.xpose.msra.mxu0 0.0
  %429 = vmatprep.subr.mxu0 0.0
  %430 = vmatpush1.xpose.msra.mxu0 0.0
  %431 = vmatprep.subr.mxu0 0.0
  %432 = vmatpush1.xpose.msra.mxu0 0.0
  %433 = vmatprep.subr.mxu0 0.0
  %434 = vmatpush1.xpose.msra.mxu0 0.0
  %435 = vmatprep.subr.mxu0 0.0
  %436 = vmatpush1.xpose.msra.mxu0 0.0
  %437 = vmatprep.subr.mxu0 0.0
  %438 = vmatpush1.xpose.msra.mxu0 %v405
  %439 = vmatprep.subr.mxu0 0.0
  %440 = vmatpush2.xpose.msra.mxu0 0.0
  %441 = vmatprep.subr.mxu0 0.0
  %442 = vmatpush2.xpose.msra.mxu0 0.0
  %443 = vmatprep.subr.mxu0 0.0
  %444 = vmatpush2.xpose.msra.mxu0 0.0
  %445 = vmatprep.subr.mxu0 0.0
  %446 = vmatpush2.xpose.msra.mxu0 0.0
  %447 = vmatprep.subr.mxu0 0.0
  %448 = vmatpush2.xpose.msra.mxu0 0.0
  %449 = vmatprep.subr.mxu0 0.0
  %450 = vmatpush2.xpose.msra.mxu0 0.0
  %451 = vmatprep.subr.mxu0 0.0
  %452 = vmatpush2.xpose.msra.mxu0 0.0
  %453 = vmatprep.subr.mxu0 0.0
  %454 = vmatpush2.xpose.msra.mxu0 0.0
  %455 = vmatprep.subr.mxu0 0.0
  %456 = vmatpush2.xpose.msra.mxu0 0.0
  %457 = vmatprep.subr.mxu0 0.0
  %458 = vmatpush2.xpose.msra.mxu0 0.0
  %459 = vmatprep.subr.mxu0 0.0
  %460 = vmatpush2.xpose.msra.mxu0 0.0
  %461 = vmatprep.subr.mxu0 0.0
  %462 = vmatpush2.xpose.msra.mxu0 0.0
  %463 = vmatprep.subr.mxu0 0.0
  %464 = vmatpush2.xpose.msra.mxu0 0.0
  %465 = vmatprep.subr.mxu0 0.0
  %466 = vmatpush2.xpose.msra.mxu0 0.0
  %467 = vmatprep.subr.mxu0 0.0
  %468 = vmatpush2.xpose.msra.mxu0 0.0
  %469 = vmatprep.subr.mxu0 0.0
  %470 = vmatpush2.xpose.msra.mxu0 0.0
  %471 = vmatprep.mubr.f32.mxu0 0.0
  %472 = vmatmul.mubr.f32.gmra.mxu0 %v402
  %v473 = vpop.f32.mrf.mxu0
  %v474 = vadd.f32 0.0, %v473
  %v475 = vpop.f32.mrf.mxu0
  %476 = vdwg.mxu0
  %v478 = vsel %vm53, %v150, 0
  %v481 = vsel %vm53, %v259, 0
  %483 = vmatprep.subr.mxu0 0.0
  %484 = vmatpush1.xpose.msra.mxu0 0.0
  %485 = vmatprep.subr.mxu0 0.0
  %486 = vmatpush1.xpose.msra.mxu0 0.0
  %487 = vmatprep.subr.mxu0 0.0
  %488 = vmatpush1.xpose.msra.mxu0 0.0
  %489 = vmatprep.subr.mxu0 0.0
  %490 = vmatpush1.xpose.msra.mxu0 0.0
  %491 = vmatprep.subr.mxu0 0.0
  %492 = vmatpush1.xpose.msra.mxu0 0.0
  %493 = vmatprep.subr.mxu0 0.0
  %494 = vmatpush1.xpose.msra.mxu0 0.0
  %495 = vmatprep.subr.mxu0 0.0
  %496 = vmatpush1.xpose.msra.mxu0 0.0
  %497 = vmatprep.subr.mxu0 0.0
  %498 = vmatpush1.xpose.msra.mxu0 0.0
  %499 = vmatprep.subr.mxu0 0.0
  %500 = vmatpush1.xpose.msra.mxu0 0.0
  %501 = vmatprep.subr.mxu0 0.0
  %502 = vmatpush1.xpose.msra.mxu0 0.0
  %503 = vmatprep.subr.mxu0 0.0
  %504 = vmatpush1.xpose.msra.mxu0 0.0
  %505 = vmatprep.subr.mxu0 0.0
  %506 = vmatpush1.xpose.msra.mxu0 0.0
  %507 = vmatprep.subr.mxu0 0.0
  %508 = vmatpush1.xpose.msra.mxu0 0.0
  %509 = vmatprep.subr.mxu0 0.0
  %510 = vmatpush1.xpose.msra.mxu0 0.0
  %511 = vmatprep.subr.mxu0 0.0
  %512 = vmatpush1.xpose.msra.mxu0 0.0
  %513 = vmatprep.subr.mxu0 0.0
  %514 = vmatpush1.xpose.msra.mxu0 %v481
  %515 = vmatprep.subr.mxu0 0.0
  %516 = vmatpush2.xpose.msra.mxu0 0.0
  %517 = vmatprep.subr.mxu0 0.0
  %518 = vmatpush2.xpose.msra.mxu0 0.0
  %519 = vmatprep.subr.mxu0 0.0
  %520 = vmatpush2.xpose.msra.mxu0 0.0
  %521 = vmatprep.subr.mxu0 0.0
  %522 = vmatpush2.xpose.msra.mxu0 0.0
  %523 = vmatprep.subr.mxu0 0.0
  %524 = vmatpush2.xpose.msra.mxu0 0.0
  %525 = vmatprep.subr.mxu0 0.0
  %526 = vmatpush2.xpose.msra.mxu0 0.0
  %527 = vmatprep.subr.mxu0 0.0
  %528 = vmatpush2.xpose.msra.mxu0 0.0
  %529 = vmatprep.subr.mxu0 0.0
  %530 = vmatpush2.xpose.msra.mxu0 0.0
  %531 = vmatprep.subr.mxu0 0.0
  %532 = vmatpush2.xpose.msra.mxu0 0.0
  %533 = vmatprep.subr.mxu0 0.0
  %534 = vmatpush2.xpose.msra.mxu0 0.0
  %535 = vmatprep.subr.mxu0 0.0
  %536 = vmatpush2.xpose.msra.mxu0 0.0
  %537 = vmatprep.subr.mxu0 0.0
  %538 = vmatpush2.xpose.msra.mxu0 0.0
  %539 = vmatprep.subr.mxu0 0.0
  %540 = vmatpush2.xpose.msra.mxu0 0.0
  %541 = vmatprep.subr.mxu0 0.0
  %542 = vmatpush2.xpose.msra.mxu0 0.0
  %543 = vmatprep.subr.mxu0 0.0
  %544 = vmatpush2.xpose.msra.mxu0 0.0
  %545 = vmatprep.subr.mxu0 0.0
  %546 = vmatpush2.xpose.msra.mxu0 0.0
  %547 = vmatprep.mubr.f32.mxu0 0.0
  %548 = vmatmul.mubr.f32.gmra.mxu0 %v478
  %v549 = vpop.f32.mrf.mxu0
  %v550 = vadd.f32 0.0, %v549
  %v551 = vpop.f32.mrf.mxu0
  %552 = vdwg.mxu0
  %v554 = vsel %vm53, %v155, 0
  %v557 = vsel %vm53, %v264, 0
  %559 = vmatprep.subr.mxu0 0.0
  %560 = vmatpush1.xpose.msra.mxu0 0.0
  %561 = vmatprep.subr.mxu0 0.0
  %562 = vmatpush1.xpose.msra.mxu0 0.0
  %563 = vmatprep.subr.mxu0 0.0
  %564 = vmatpush1.xpose.msra.mxu0 0.0
  %565 = vmatprep.subr.mxu0 0.0
  %566 = vmatpush1.xpose.msra.mxu0 0.0
  %567 = vmatprep.subr.mxu0 0.0
  %568 = vmatpush1.xpose.msra.mxu0 0.0
  %569 = vmatprep.subr.mxu0 0.0
  %570 = vmatpush1.xpose.msra.mxu0 0.0
  %571 = vmatprep.subr.mxu0 0.0
  %572 = vmatpush1.xpose.msra.mxu0 0.0
  %573 = vmatprep.subr.mxu0 0.0
  %574 = vmatpush1.xpose.msra.mxu0 0.0
  %575 = vmatprep.subr.mxu0 0.0
  %576 = vmatpush1.xpose.msra.mxu0 0.0
  %577 = vmatprep.subr.mxu0 0.0
  %578 = vmatpush1.xpose.msra.mxu0 0.0
  %579 = vmatprep.subr.mxu0 0.0
  %580 = vmatpush1.xpose.msra.mxu0 0.0
  %581 = vmatprep.subr.mxu0 0.0
  %582 = vmatpush1.xpose.msra.mxu0 0.0
  %583 = vmatprep.subr.mxu0 0.0
  %584 = vmatpush1.xpose.msra.mxu0 0.0
  %585 = vmatprep.subr.mxu0 0.0
  %586 = vmatpush1.xpose.msra.mxu0 0.0
  %587 = vmatprep.subr.mxu0 0.0
  %588 = vmatpush1.xpose.msra.mxu0 0.0
  %589 = vmatprep.subr.mxu0 0.0
  %590 = vmatpush1.xpose.msra.mxu0 %v557
  %591 = vmatprep.subr.mxu0 0.0
  %592 = vmatpush2.xpose.msra.mxu0 0.0
  %593 = vmatprep.subr.mxu0 0.0
  %594 = vmatpush2.xpose.msra.mxu0 0.0
  %595 = vmatprep.subr.mxu0 0.0
  %596 = vmatpush2.xpose.msra.mxu0 0.0
  %597 = vmatprep.subr.mxu0 0.0
  %598 = vmatpush2.xpose.msra.mxu0 0.0
  %599 = vmatprep.subr.mxu0 0.0
  %600 = vmatpush2.xpose.msra.mxu0 0.0
  %601 = vmatprep.subr.mxu0 0.0
  %602 = vmatpush2.xpose.msra.mxu0 0.0
  %603 = vmatprep.subr.mxu0 0.0
  %604 = vmatpush2.xpose.msra.mxu0 0.0
  %605 = vmatprep.subr.mxu0 0.0
  %606 = vmatpush2.xpose.msra.mxu0 0.0
  %607 = vmatprep.subr.mxu0 0.0
  %608 = vmatpush2.xpose.msra.mxu0 0.0
  %609 = vmatprep.subr.mxu0 0.0
  %610 = vmatpush2.xpose.msra.mxu0 0.0
  %611 = vmatprep.subr.mxu0 0.0
  %612 = vmatpush2.xpose.msra.mxu0 0.0
  %613 = vmatprep.subr.mxu0 0.0
  %614 = vmatpush2.xpose.msra.mxu0 0.0
  %615 = vmatprep.subr.mxu0 0.0
  %616 = vmatpush2.xpose.msra.mxu0 0.0
  %617 = vmatprep.subr.mxu0 0.0
  %618 = vmatpush2.xpose.msra.mxu0 0.0
  %619 = vmatprep.subr.mxu0 0.0
  %620 = vmatpush2.xpose.msra.mxu0 0.0
  %621 = vmatprep.subr.mxu0 0.0
  %622 = vmatpush2.xpose.msra.mxu0 0.0
  %623 = vmatprep.mubr.f32.mxu0 0.0
  %624 = vmatmul.mubr.f32.gmra.mxu0 %v554
  %v625 = vpop.f32.mrf.mxu0
  %v626 = vadd.f32 0.0, %v625
  %v627 = vpop.f32.mrf.mxu0
  %628 = vdwg.mxu0
  %v630 = vsel %vm53, %v160, 0
  %v633 = vsel %vm53, %v269, 0
  %635 = vmatprep.subr.mxu0 0.0
  %636 = vmatpush1.xpose.msra.mxu0 0.0
  %637 = vmatprep.subr.mxu0 0.0
  %638 = vmatpush1.xpose.msra.mxu0 0.0
  %639 = vmatprep.subr.mxu0 0.0
  %640 = vmatpush1.xpose.msra.mxu0 0.0
  %641 = vmatprep.subr.mxu0 0.0
  %642 = vmatpush1.xpose.msra.mxu0 0.0
  %643 = vmatprep.subr.mxu0 0.0
  %644 = vmatpush1.xpose.msra.mxu0 0.0
  %645 = vmatprep.subr.mxu0 0.0
  %646 = vmatpush1.xpose.msra.mxu0 0.0
  %647 = vmatprep.subr.mxu0 0.0
  %648 = vmatpush1.xpose.msra.mxu0 0.0
  %649 = vmatprep.subr.mxu0 0.0
  %650 = vmatpush1.xpose.msra.mxu0 0.0
  %651 = vmatprep.subr.mxu0 0.0
  %652 = vmatpush1.xpose.msra.mxu0 0.0
  %653 = vmatprep.subr.mxu0 0.0
  %654 = vmatpush1.xpose.msra.mxu0 0.0
  %655 = vmatprep.subr.mxu0 0.0
  %656 = vmatpush1.xpose.msra.mxu0 0.0
  %657 = vmatprep.subr.mxu0 0.0
  %658 = vmatpush1.xpose.msra.mxu0 0.0
  %659 = vmatprep.subr.mxu0 0.0
  %660 = vmatpush1.xpose.msra.mxu0 0.0
  %661 = vmatprep.subr.mxu0 0.0
  %662 = vmatpush1.xpose.msra.mxu0 0.0
  %663 = vmatprep.subr.mxu0 0.0
  %664 = vmatpush1.xpose.msra.mxu0 0.0
  %665 = vmatprep.subr.mxu0 0.0
  %666 = vmatpush1.xpose.msra.mxu0 %v633
  %667 = vmatprep.subr.mxu0 0.0
  %668 = vmatpush2.xpose.msra.mxu0 0.0
  %669 = vmatprep.subr.mxu0 0.0
  %670 = vmatpush2.xpose.msra.mxu0 0.0
  %671 = vmatprep.subr.mxu0 0.0
  %672 = vmatpush2.xpose.msra.mxu0 0.0
  %673 = vmatprep.subr.mxu0 0.0
  %674 = vmatpush2.xpose.msra.mxu0 0.0
  %675 = vmatprep.subr.mxu0 0.0
  %676 = vmatpush2.xpose.msra.mxu0 0.0
  %677 = vmatprep.subr.mxu0 0.0
  %678 = vmatpush2.xpose.msra.mxu0 0.0
  %679 = vmatprep.subr.mxu0 0.0
  %680 = vmatpush2.xpose.msra.mxu0 0.0
  %681 = vmatprep.subr.mxu0 0.0
  %682 = vmatpush2.xpose.msra.mxu0 0.0
  %683 = vmatprep.subr.mxu0 0.0
  %684 = vmatpush2.xpose.msra.mxu0 0.0
  %685 = vmatprep.subr.mxu0 0.0
  %686 = vmatpush2.xpose.msra.mxu0 0.0
  %687 = vmatprep.subr.mxu0 0.0
  %688 = vmatpush2.xpose.msra.mxu0 0.0
  %689 = vmatprep.subr.mxu0 0.0
  %690 = vmatpush2.xpose.msra.mxu0 0.0
  %691 = vmatprep.subr.mxu0 0.0
  %692 = vmatpush2.xpose.msra.mxu0 0.0
  %693 = vmatprep.subr.mxu0 0.0
  %694 = vmatpush2.xpose.msra.mxu0 0.0
  %695 = vmatprep.subr.mxu0 0.0
  %696 = vmatpush2.xpose.msra.mxu0 0.0
  %697 = vmatprep.subr.mxu0 0.0
  %698 = vmatpush2.xpose.msra.mxu0 0.0
  %699 = vmatprep.mubr.f32.mxu0 0.0
  %700 = vmatmul.mubr.f32.gmra.mxu0 %v630
  %v701 = vpop.f32.mrf.mxu0
  %v702 = vadd.f32 0.0, %v701
  %v703 = vpop.f32.mrf.mxu0
  %704 = vdwg.mxu0
  %v706 = vsel %vm53, %v165, 0
  %v709 = vsel %vm53, %v274, 0
  %711 = vmatprep.subr.mxu0 0.0
  %712 = vmatpush1.xpose.msra.mxu0 0.0
  %713 = vmatprep.subr.mxu0 0.0
  %714 = vmatpush1.xpose.msra.mxu0 0.0
  %715 = vmatprep.subr.mxu0 0.0
  %716 = vmatpush1.xpose.msra.mxu0 0.0
  %717 = vmatprep.subr.mxu0 0.0
  %718 = vmatpush1.xpose.msra.mxu0 0.0
  %719 = vmatprep.subr.mxu0 0.0
  %720 = vmatpush1.xpose.msra.mxu0 0.0
  %721 = vmatprep.subr.mxu0 0.0
  %722 = vmatpush1.xpose.msra.mxu0 0.0
  %723 = vmatprep.subr.mxu0 0.0
  %724 = vmatpush1.xpose.msra.mxu0 0.0
  %725 = vmatprep.subr.mxu0 0.0
  %726 = vmatpush1.xpose.msra.mxu0 0.0
  %727 = vmatprep.subr.mxu0 0.0
  %728 = vmatpush1.xpose.msra.mxu0 0.0
  %729 = vmatprep.subr.mxu0 0.0
  %730 = vmatpush1.xpose.msra.mxu0 0.0
  %731 = vmatprep.subr.mxu0 0.0
  %732 = vmatpush1.xpose.msra.mxu0 0.0
  %733 = vmatprep.subr.mxu0 0.0
  %734 = vmatpush1.xpose.msra.mxu0 0.0
  %735 = vmatprep.subr.mxu0 0.0
  %736 = vmatpush1.xpose.msra.mxu0 0.0
  %737 = vmatprep.subr.mxu0 0.0
  %738 = vmatpush1.xpose.msra.mxu0 0.0
  %739 = vmatprep.subr.mxu0 0.0
  %740 = vmatpush1.xpose.msra.mxu0 0.0
  %741 = vmatprep.subr.mxu0 0.0
  %742 = vmatpush1.xpose.msra.mxu0 %v709
  %743 = vmatprep.subr.mxu0 0.0
  %744 = vmatpush2.xpose.msra.mxu0 0.0
  %745 = vmatprep.subr.mxu0 0.0
  %746 = vmatpush2.xpose.msra.mxu0 0.0
  %747 = vmatprep.subr.mxu0 0.0
  %748 = vmatpush2.xpose.msra.mxu0 0.0
  %749 = vmatprep.subr.mxu0 0.0
  %750 = vmatpush2.xpose.msra.mxu0 0.0
  %751 = vmatprep.subr.mxu0 0.0
  %752 = vmatpush2.xpose.msra.mxu0 0.0
  %753 = vmatprep.subr.mxu0 0.0
  %754 = vmatpush2.xpose.msra.mxu0 0.0
  %755 = vmatprep.subr.mxu0 0.0
  %756 = vmatpush2.xpose.msra.mxu0 0.0
  %757 = vmatprep.subr.mxu0 0.0
  %758 = vmatpush2.xpose.msra.mxu0 0.0
  %759 = vmatprep.subr.mxu0 0.0
  %760 = vmatpush2.xpose.msra.mxu0 0.0
  %761 = vmatprep.subr.mxu0 0.0
  %762 = vmatpush2.xpose.msra.mxu0 0.0
  %763 = vmatprep.subr.mxu0 0.0
  %764 = vmatpush2.xpose.msra.mxu0 0.0
  %765 = vmatprep.subr.mxu0 0.0
  %766 = vmatpush2.xpose.msra.mxu0 0.0
  %767 = vmatprep.subr.mxu0 0.0
  %768 = vmatpush2.xpose.msra.mxu0 0.0
  %769 = vmatprep.subr.mxu0 0.0
  %770 = vmatpush2.xpose.msra.mxu0 0.0
  %771 = vmatprep.subr.mxu0 0.0
  %772 = vmatpush2.xpose.msra.mxu0 0.0
  %773 = vmatprep.subr.mxu0 0.0
  %774 = vmatpush2.xpose.msra.mxu0 0.0
  %775 = vmatprep.mubr.f32.mxu0 0.0
  %776 = vmatmul.mubr.f32.gmra.mxu0 %v706
  %v777 = vpop.f32.mrf.mxu0
  %v778 = vadd.f32 0.0, %v777
  %v779 = vpop.f32.mrf.mxu0
  %780 = vdwg.mxu0
  %v782 = vsel %vm53, %v170, 0
  %v785 = vsel %vm53, %v279, 0
  %787 = vmatprep.subr.mxu0 0.0
  %788 = vmatpush1.xpose.msra.mxu0 0.0
  %789 = vmatprep.subr.mxu0 0.0
  %790 = vmatpush1.xpose.msra.mxu0 0.0
  %791 = vmatprep.subr.mxu0 0.0
  %792 = vmatpush1.xpose.msra.mxu0 0.0
  %793 = vmatprep.subr.mxu0 0.0
  %794 = vmatpush1.xpose.msra.mxu0 0.0
  %795 = vmatprep.subr.mxu0 0.0
  %796 = vmatpush1.xpose.msra.mxu0 0.0
  %797 = vmatprep.subr.mxu0 0.0
  %798 = vmatpush1.xpose.msra.mxu0 0.0
  %799 = vmatprep.subr.mxu0 0.0
  %800 = vmatpush1.xpose.msra.mxu0 0.0
  %801 = vmatprep.subr.mxu0 0.0
  %802 = vmatpush1.xpose.msra.mxu0 0.0
  %803 = vmatprep.subr.mxu0 0.0
  %804 = vmatpush1.xpose.msra.mxu0 0.0
  %805 = vmatprep.subr.mxu0 0.0
  %806 = vmatpush1.xpose.msra.mxu0 0.0
  %807 = vmatprep.subr.mxu0 0.0
  %808 = vmatpush1.xpose.msra.mxu0 0.0
  %809 = vmatprep.subr.mxu0 0.0
  %810 = vmatpush1.xpose.msra.mxu0 0.0
  %811 = vmatprep.subr.mxu0 0.0
  %812 = vmatpush1.xpose.msra.mxu0 0.0
  %813 = vmatprep.subr.mxu0 0.0
  %814 = vmatpush1.xpose.msra.mxu0 0.0
  %815 = vmatprep.subr.mxu0 0.0
  %816 = vmatpush1.xpose.msra.mxu0 0.0
  %817 = vmatprep.subr.mxu0 0.0
  %818 = vmatpush1.xpose.msra.mxu0 %v785
  %819 = vmatprep.subr.mxu0 0.0
  %820 = vmatpush2.xpose.msra.mxu0 0.0
  %821 = vmatprep.subr.mxu0 0.0
  %822 = vmatpush2.xpose.msra.mxu0 0.0
  %823 = vmatprep.subr.mxu0 0.0
  %824 = vmatpush2.xpose.msra.mxu0 0.0
  %825 = vmatprep.subr.mxu0 0.0
  %826 = vmatpush2.xpose.msra.mxu0 0.0
  %827 = vmatprep.subr.mxu0 0.0
  %828 = vmatpush2.xpose.msra.mxu0 0.0
  %829 = vmatprep.subr.mxu0 0.0
  %830 = vmatpush2.xpose.msra.mxu0 0.0
  %831 = vmatprep.subr.mxu0 0.0
  %832 = vmatpush2.xpose.msra.mxu0 0.0
  %833 = vmatprep.subr.mxu0 0.0
  %834 = vmatpush2.xpose.msra.mxu0 0.0
  %835 = vmatprep.subr.mxu0 0.0
  %836 = vmatpush2.xpose.msra.mxu0 0.0
  %837 = vmatprep.subr.mxu0 0.0
  %838 = vmatpush2.xpose.msra.mxu0 0.0
  %839 = vmatprep.subr.mxu0 0.0
  %840 = vmatpush2.xpose.msra.mxu0 0.0
  %841 = vmatprep.subr.mxu0 0.0
  %842 = vmatpush2.xpose.msra.mxu0 0.0
  %843 = vmatprep.subr.mxu0 0.0
  %844 = vmatpush2.xpose.msra.mxu0 0.0
  %845 = vmatprep.subr.mxu0 0.0
  %846 = vmatpush2.xpose.msra.mxu0 0.0
  %847 = vmatprep.subr.mxu0 0.0
  %848 = vmatpush2.xpose.msra.mxu0 0.0
  %849 = vmatprep.subr.mxu0 0.0
  %850 = vmatpush2.xpose.msra.mxu0 0.0
  %851 = vmatprep.mubr.f32.mxu0 0.0
  %852 = vmatmul.mubr.f32.gmra.mxu0 %v782
  %v853 = vpop.f32.mrf.mxu0
  %v854 = vadd.f32 0.0, %v853
  %v855 = vpop.f32.mrf.mxu0
  %856 = vdwg.mxu0
  %v858 = vsel %vm53, %v175, 0
  %v861 = vsel %vm53, %v284, 0
  %863 = vmatprep.subr.mxu0 0.0
  %864 = vmatpush1.xpose.msra.mxu0 0.0
  %865 = vmatprep.subr.mxu0 0.0
  %866 = vmatpush1.xpose.msra.mxu0 0.0
  %867 = vmatprep.subr.mxu0 0.0
  %868 = vmatpush1.xpose.msra.mxu0 0.0
  %869 = vmatprep.subr.mxu0 0.0
  %870 = vmatpush1.xpose.msra.mxu0 0.0
  %871 = vmatprep.subr.mxu0 0.0
  %872 = vmatpush1.xpose.msra.mxu0 0.0
  %873 = vmatprep.subr.mxu0 0.0
  %874 = vmatpush1.xpose.msra.mxu0 0.0
  %875 = vmatprep.subr.mxu0 0.0
  %876 = vmatpush1.xpose.msra.mxu0 0.0
  %877 = vmatprep.subr.mxu0 0.0
  %878 = vmatpush1.xpose.msra.mxu0 0.0
  %879 = vmatprep.subr.mxu0 0.0
  %880 = vmatpush1.xpose.msra.mxu0 0.0
  %881 = vmatprep.subr.mxu0 0.0
  %882 = vmatpush1.xpose.msra.mxu0 0.0
  %883 = vmatprep.subr.mxu0 0.0
  %884 = vmatpush1.xpose.msra.mxu0 0.0
  %885 = vmatprep.subr.mxu0 0.0
  %886 = vmatpush1.xpose.msra.mxu0 0.0
  %887 = vmatprep.subr.mxu0 0.0
  %888 = vmatpush1.xpose.msra.mxu0 0.0
  %889 = vmatprep.subr.mxu0 0.0
  %890 = vmatpush1.xpose.msra.mxu0 0.0
  %891 = vmatprep.subr.mxu0 0.0
  %892 = vmatpush1.xpose.msra.mxu0 0.0
  %893 = vmatprep.subr.mxu0 0.0
  %894 = vmatpush1.xpose.msra.mxu0 %v861
  %895 = vmatprep.subr.mxu0 0.0
  %896 = vmatpush2.xpose.msra.mxu0 0.0
  %897 = vmatprep.subr.mxu0 0.0
  %898 = vmatpush2.xpose.msra.mxu0 0.0
  %899 = vmatprep.subr.mxu0 0.0
  %900 = vmatpush2.xpose.msra.mxu0 0.0
  %901 = vmatprep.subr.mxu0 0.0
  %902 = vmatpush2.xpose.msra.mxu0 0.0
  %903 = vmatprep.subr.mxu0 0.0
  %904 = vmatpush2.xpose.msra.mxu0 0.0
  %905 = vmatprep.subr.mxu0 0.0
  %906 = vmatpush2.xpose.msra.mxu0 0.0
  %907 = vmatprep.subr.mxu0 0.0
  %908 = vmatpush2.xpose.msra.mxu0 0.0
  %909 = vmatprep.subr.mxu0 0.0
  %910 = vmatpush2.xpose.msra.mxu0 0.0
  %911 = vmatprep.subr.mxu0 0.0
  %912 = vmatpush2.xpose.msra.mxu0 0.0
  %913 = vmatprep.subr.mxu0 0.0
  %914 = vmatpush2.xpose.msra.mxu0 0.0
  %915 = vmatprep.subr.mxu0 0.0
  %916 = vmatpush2.xpose.msra.mxu0 0.0
  %917 = vmatprep.subr.mxu0 0.0
  %918 = vmatpush2.xpose.msra.mxu0 0.0
  %919 = vmatprep.subr.mxu0 0.0
  %920 = vmatpush2.xpose.msra.mxu0 0.0
  %921 = vmatprep.subr.mxu0 0.0
  %922 = vmatpush2.xpose.msra.mxu0 0.0
  %923 = vmatprep.subr.mxu0 0.0
  %924 = vmatpush2.xpose.msra.mxu0 0.0
  %925 = vmatprep.subr.mxu0 0.0
  %926 = vmatpush2.xpose.msra.mxu0 0.0
  %927 = vmatprep.mubr.f32.mxu0 0.0
  %928 = vmatmul.mubr.f32.gmra.mxu0 %v858
  %v929 = vpop.f32.mrf.mxu0
  %v930 = vadd.f32 0.0, %v929
  %v931 = vpop.f32.mrf.mxu0
  %932 = vdwg.mxu0
  %v934 = vsel %vm53, %v180, 0
  %v937 = vsel %vm53, %v289, 0
  %939 = vmatprep.subr.mxu0 0.0
  %940 = vmatpush1.xpose.msra.mxu0 0.0
  %941 = vmatprep.subr.mxu0 0.0
  %942 = vmatpush1.xpose.msra.mxu0 0.0
  %943 = vmatprep.subr.mxu0 0.0
  %944 = vmatpush1.xpose.msra.mxu0 0.0
  %945 = vmatprep.subr.mxu0 0.0
  %946 = vmatpush1.xpose.msra.mxu0 0.0
  %947 = vmatprep.subr.mxu0 0.0
  %948 = vmatpush1.xpose.msra.mxu0 0.0
  %949 = vmatprep.subr.mxu0 0.0
  %950 = vmatpush1.xpose.msra.mxu0 0.0
  %951 = vmatprep.subr.mxu0 0.0
  %952 = vmatpush1.xpose.msra.mxu0 0.0
  %953 = vmatprep.subr.mxu0 0.0
  %954 = vmatpush1.xpose.msra.mxu0 0.0
  %955 = vmatprep.subr.mxu0 0.0
  %956 = vmatpush1.xpose.msra.mxu0 0.0
  %957 = vmatprep.subr.mxu0 0.0
  %958 = vmatpush1.xpose.msra.mxu0 0.0
  %959 = vmatprep.subr.mxu0 0.0
  %960 = vmatpush1.xpose.msra.mxu0 0.0
  %961 = vmatprep.subr.mxu0 0.0
  %962 = vmatpush1.xpose.msra.mxu0 0.0
  %963 = vmatprep.subr.mxu0 0.0
  %964 = vmatpush1.xpose.msra.mxu0 0.0
  %965 = vmatprep.subr.mxu0 0.0
  %966 = vmatpush1.xpose.msra.mxu0 0.0
  %967 = vmatprep.subr.mxu0 0.0
  %968 = vmatpush1.xpose.msra.mxu0 0.0
  %969 = vmatprep.subr.mxu0 0.0
  %970 = vmatpush1.xpose.msra.mxu0 %v937
  %971 = vmatprep.subr.mxu0 0.0
  %972 = vmatpush2.xpose.msra.mxu0 0.0
  %973 = vmatprep.subr.mxu0 0.0
  %974 = vmatpush2.xpose.msra.mxu0 0.0
  %975 = vmatprep.subr.mxu0 0.0
  %976 = vmatpush2.xpose.msra.mxu0 0.0
  %977 = vmatprep.subr.mxu0 0.0
  %978 = vmatpush2.xpose.msra.mxu0 0.0
  %979 = vmatprep.subr.mxu0 0.0
  %980 = vmatpush2.xpose.msra.mxu0 0.0
  %981 = vmatprep.subr.mxu0 0.0
  %982 = vmatpush2.xpose.msra.mxu0 0.0
  %983 = vmatprep.subr.mxu0 0.0
  %984 = vmatpush2.xpose.msra.mxu0 0.0
  %985 = vmatprep.subr.mxu0 0.0
  %986 = vmatpush2.xpose.msra.mxu0 0.0
  %987 = vmatprep.subr.mxu0 0.0
  %988 = vmatpush2.xpose.msra.mxu0 0.0
  %989 = vmatprep.subr.mxu0 0.0
  %990 = vmatpush2.xpose.msra.mxu0 0.0
  %991 = vmatprep.subr.mxu0 0.0
  %992 = vmatpush2.xpose.msra.mxu0 0.0
  %993 = vmatprep.subr.mxu0 0.0
  %994 = vmatpush2.xpose.msra.mxu0 0.0
  %995 = vmatprep.subr.mxu0 0.0
  %996 = vmatpush2.xpose.msra.mxu0 0.0
  %997 = vmatprep.subr.mxu0 0.0
  %998 = vmatpush2.xpose.msra.mxu0 0.0
  %999 = vmatprep.subr.mxu0 0.0
  %1000 = vmatpush2.xpose.msra.mxu0 0.0
  %1001 = vmatprep.subr.mxu0 0.0
  %1002 = vmatpush2.xpose.msra.mxu0 0.0
  %1003 = vmatprep.mubr.f32.mxu0 0.0
  %1004 = vmatmul.mubr.f32.gmra.mxu0 %v934
  %v1005 = vpop.f32.mrf.mxu0
  %v1006 = vadd.f32 0.0, %v1005
  %v1007 = vpop.f32.mrf.mxu0
  %1008 = vdwg.mxu0
  %vm1009 = vcmask 64512
  %v1010 = vsel %vm1009, %v474, -inf
  %1011 = vmax.xlane.f32.xlu0 %v1010
  %v1012 = vpop.xlane.xlu0 %1011
  %v1013 = vsel %vm1009, %v550, -inf
  %1014 = vmax.xlane.f32.xlu0 %v1013
  %v1015 = vpop.xlane.xlu0 %1014
  %v1016 = vsel %vm1009, %v626, -inf
  %1017 = vmax.xlane.f32.xlu0 %v1016
  %v1018 = vpop.xlane.xlu0 %1017
  %v1019 = vsel %vm1009, %v702, -inf
  %1020 = vmax.xlane.f32.xlu0 %v1019
  %v1021 = vpop.xlane.xlu0 %1020
  %v1022 = vsel %vm1009, %v778, -inf
  %1023 = vmax.xlane.f32.xlu0 %v1022
  %v1024 = vpop.xlane.xlu0 %1023
  %v1025 = vsel %vm1009, %v854, -inf
  %1026 = vmax.xlane.f32.xlu0 %v1025
  %v1027 = vpop.xlane.xlu0 %1026
  %v1028 = vsel %vm1009, %v930, -inf
  %1029 = vmax.xlane.f32.xlu0 %v1028
  %v1030 = vpop.xlane.xlu0 %1029
  %v1031 = vsel %vm1009, %v1006, -inf
  %1032 = vmax.xlane.f32.xlu0 %v1031
  %v1033 = vpop.xlane.xlu0 %1032
  %v1034 = vsub.f32 %v474, %v1012
  %v1035 = vsub.f32 %v550, %v1015
  %v1036 = vsub.f32 %v626, %v1018
  %v1037 = vsub.f32 %v702, %v1021
  %v1038 = vsub.f32 %v778, %v1024
  %v1039 = vsub.f32 %v854, %v1027
  %v1040 = vsub.f32 %v930, %v1030
  %v1041 = vsub.f32 %v1006, %v1033
  %v1042 = vmul.f32 %v1034, 1.442695
  %v1043 = vpow.pop %v1042
  %v1044 = vmul.f32 %v1035, 1.442695
  %v1045 = vpow.pop %v1044
  %v1046 = vmul.f32 %v1036, 1.442695
  %v1047 = vpow.pop %v1046
  %v1048 = vmul.f32 %v1037, 1.442695
  %v1049 = vpow.pop %v1048
  %v1050 = vmul.f32 %v1038, 1.442695
  %v1051 = vpow.pop %v1050
  %v1052 = vmul.f32 %v1039, 1.442695
  %v1053 = vpow.pop %v1052
  %v1054 = vmul.f32 %v1040, 1.442695
  %v1055 = vpow.pop %v1054
  %v1056 = vmul.f32 %v1041, 1.442695
  %v1057 = vpow.pop %v1056
  %v1058 = vsel %vm1009, %v1043, 0.0
  %1059 = vadd.xlane.f32.xlu0 %v1058
  %v1060 = vpop.xlane.xlu0 %1059
  %v1061 = vsel %vm1009, %v1045, 0.0
  %1062 = vadd.xlane.f32.xlu0 %v1061
  %v1063 = vpop.xlane.xlu0 %1062
  %v1064 = vsel %vm1009, %v1047, 0.0
  %1065 = vadd.xlane.f32.xlu0 %v1064
  %v1066 = vpop.xlane.xlu0 %1065
  %v1067 = vsel %vm1009, %v1049, 0.0
  %1068 = vadd.xlane.f32.xlu0 %v1067
  %v1069 = vpop.xlane.xlu0 %1068
  %v1070 = vsel %vm1009, %v1051, 0.0
  %1071 = vadd.xlane.f32.xlu0 %v1070
  %v1072 = vpop.xlane.xlu0 %1071
  %v1073 = vsel %vm1009, %v1053, 0.0
  %1074 = vadd.xlane.f32.xlu0 %v1073
  %v1075 = vpop.xlane.xlu0 %1074
  %v1076 = vsel %vm1009, %v1055, 0.0
  %1077 = vadd.xlane.f32.xlu0 %v1076
  %v1078 = vpop.xlane.xlu0 %1077
  %v1079 = vsel %vm1009, %v1057, 0.0
  %1080 = vadd.xlane.f32.xlu0 %v1079
  %v1081 = vpop.xlane.xlu0 %1080
  %v1082 = vrcp.pop %v1060
  %v1083 = vrcp.pop %v1063
  %v1084 = vrcp.pop %v1066
  %v1085 = vrcp.pop %v1069
  %v1086 = vrcp.pop %v1072
  %v1087 = vrcp.pop %v1075
  %v1088 = vrcp.pop %v1078
  %v1089 = vrcp.pop %v1081
  %v1090 = vmul.f32 %v1043, %v1082
  %v1091 = vmul.f32 %v1045, %v1083
  %v1092 = vmul.f32 %v1047, %v1084
  %v1093 = vmul.f32 %v1049, %v1085
  %v1094 = vmul.f32 %v1051, %v1086
  %v1095 = vmul.f32 %v1053, %v1087
  %v1096 = vmul.f32 %v1055, %v1088
  %v1097 = vmul.f32 %v1057, %v1089
  %v1099 = vsel %vm1009, %v1090, 0
  %1101 = vmatprep.subr.mxu0 0.0
  %1102 = vmatpush1.msra.mxu0 0.0
  %1103 = vmatprep.subr.mxu0 0.0
  %1104 = vmatpush1.msra.mxu0 0.0
  %1105 = vmatprep.subr.mxu0 0.0
  %1106 = vmatpush1.msra.mxu0 0.0
  %1107 = vmatprep.subr.mxu0 0.0
  %1108 = vmatpush1.msra.mxu0 0.0
  %1109 = vmatprep.subr.mxu0 0.0
  %1110 = vmatpush1.msra.mxu0 0.0
  %1111 = vmatprep.subr.mxu0 0.0
  %1112 = vmatpush1.msra.mxu0 0.0
  %1113 = vmatprep.subr.mxu0 0.0
  %1114 = vmatpush1.msra.mxu0 0.0
  %1115 = vmatprep.subr.mxu0 0.0
  %1116 = vmatpush1.msra.mxu0 0.0
  %1117 = vmatprep.subr.mxu0 0.0
  %1118 = vmatpush1.msra.mxu0 0.0
  %1119 = vmatprep.subr.mxu0 0.0
  %1120 = vmatpush1.msra.mxu0 0.0
  %1121 = vmatprep.subr.mxu0 0.0
  %1122 = vmatpush1.msra.mxu0 0.0
  %1123 = vmatprep.subr.mxu0 0.0
  %1124 = vmatpush1.msra.mxu0 0.0
  %1125 = vmatprep.subr.mxu0 0.0
  %1126 = vmatpush1.msra.mxu0 0.0
  %1127 = vmatprep.subr.mxu0 0.0
  %1128 = vmatpush1.msra.mxu0 0.0
  %1129 = vmatprep.subr.mxu0 0.0
  %1130 = vmatpush1.msra.mxu0 0.0
  %1131 = vmatprep.subr.mxu0 0.0
  %1132 = vmatpush1.msra.mxu0 %v363
  %1133 = vmatprep.subr.mxu0 0.0
  %1134 = vmatpush2.msra.mxu0 0.0
  %1135 = vmatprep.subr.mxu0 0.0
  %1136 = vmatpush2.msra.mxu0 0.0
  %1137 = vmatprep.subr.mxu0 0.0
  %1138 = vmatpush2.msra.mxu0 0.0
  %1139 = vmatprep.subr.mxu0 0.0
  %1140 = vmatpush2.msra.mxu0 0.0
  %1141 = vmatprep.subr.mxu0 0.0
  %1142 = vmatpush2.msra.mxu0 0.0
  %1143 = vmatprep.subr.mxu0 0.0
  %1144 = vmatpush2.msra.mxu0 0.0
  %1145 = vmatprep.subr.mxu0 0.0
  %1146 = vmatpush2.msra.mxu0 0.0
  %1147 = vmatprep.subr.mxu0 0.0
  %1148 = vmatpush2.msra.mxu0 0.0
  %1149 = vmatprep.subr.mxu0 0.0
  %1150 = vmatpush2.msra.mxu0 0.0
  %1151 = vmatprep.subr.mxu0 0.0
  %1152 = vmatpush2.msra.mxu0 0.0
  %1153 = vmatprep.subr.mxu0 0.0
  %1154 = vmatpush2.msra.mxu0 0.0
  %1155 = vmatprep.subr.mxu0 0.0
  %1156 = vmatpush2.msra.mxu0 0.0
  %1157 = vmatprep.subr.mxu0 0.0
  %1158 = vmatpush2.msra.mxu0 0.0
  %1159 = vmatprep.subr.mxu0 0.0
  %1160 = vmatpush2.msra.mxu0 0.0
  %1161 = vmatprep.subr.mxu0 0.0
  %1162 = vmatpush2.msra.mxu0 0.0
  %1163 = vmatprep.subr.mxu0 0.0
  %1164 = vmatpush2.msra.mxu0 0.0
  %1165 = vmatprep.mubr.f32.mxu0 0.0
  %1166 = vmatmul.mubr.f32.gmra.mxu0 %v1099
  %v1167 = vpop.f32.mrf.mxu0
  %v1168 = vadd.f32 0.0, %v1167
  %v1169 = vpop.f32.mrf.mxu0
  %1170 = vdwg.mxu0
  %v1172 = vsel %vm1009, %v1091, 0
  %1174 = vmatprep.subr.mxu0 0.0
  %1175 = vmatpush1.msra.mxu0 0.0
  %1176 = vmatprep.subr.mxu0 0.0
  %1177 = vmatpush1.msra.mxu0 0.0
  %1178 = vmatprep.subr.mxu0 0.0
  %1179 = vmatpush1.msra.mxu0 0.0
  %1180 = vmatprep.subr.mxu0 0.0
  %1181 = vmatpush1.msra.mxu0 0.0
  %1182 = vmatprep.subr.mxu0 0.0
  %1183 = vmatpush1.msra.mxu0 0.0
  %1184 = vmatprep.subr.mxu0 0.0
  %1185 = vmatpush1.msra.mxu0 0.0
  %1186 = vmatprep.subr.mxu0 0.0
  %1187 = vmatpush1.msra.mxu0 0.0
  %1188 = vmatprep.subr.mxu0 0.0
  %1189 = vmatpush1.msra.mxu0 0.0
  %1190 = vmatprep.subr.mxu0 0.0
  %1191 = vmatpush1.msra.mxu0 0.0
  %1192 = vmatprep.subr.mxu0 0.0
  %1193 = vmatpush1.msra.mxu0 0.0
  %1194 = vmatprep.subr.mxu0 0.0
  %1195 = vmatpush1.msra.mxu0 0.0
  %1196 = vmatprep.subr.mxu0 0.0
  %1197 = vmatpush1.msra.mxu0 0.0
  %1198 = vmatprep.subr.mxu0 0.0
  %1199 = vmatpush1.msra.mxu0 0.0
  %1200 = vmatprep.subr.mxu0 0.0
  %1201 = vmatpush1.msra.mxu0 0.0
  %1202 = vmatprep.subr.mxu0 0.0
  %1203 = vmatpush1.msra.mxu0 0.0
  %1204 = vmatprep.subr.mxu0 0.0
  %1205 = vmatpush1.msra.mxu0 %v368
  %1206 = vmatprep.subr.mxu0 0.0
  %1207 = vmatpush2.msra.mxu0 0.0
  %1208 = vmatprep.subr.mxu0 0.0
  %1209 = vmatpush2.msra.mxu0 0.0
  %1210 = vmatprep.subr.mxu0 0.0
  %1211 = vmatpush2.msra.mxu0 0.0
  %1212 = vmatprep.subr.mxu0 0.0
  %1213 = vmatpush2.msra.mxu0 0.0
  %1214 = vmatprep.subr.mxu0 0.0
  %1215 = vmatpush2.msra.mxu0 0.0
  %1216 = vmatprep.subr.mxu0 0.0
  %1217 = vmatpush2.msra.mxu0 0.0
  %1218 = vmatprep.subr.mxu0 0.0
  %1219 = vmatpush2.msra.mxu0 0.0
  %1220 = vmatprep.subr.mxu0 0.0
  %1221 = vmatpush2.msra.mxu0 0.0
  %1222 = vmatprep.subr.mxu0 0.0
  %1223 = vmatpush2.msra.mxu0 0.0
  %1224 = vmatprep.subr.mxu0 0.0
  %1225 = vmatpush2.msra.mxu0 0.0
  %1226 = vmatprep.subr.mxu0 0.0
  %1227 = vmatpush2.msra.mxu0 0.0
  %1228 = vmatprep.subr.mxu0 0.0
  %1229 = vmatpush2.msra.mxu0 0.0
  %1230 = vmatprep.subr.mxu0 0.0
  %1231 = vmatpush2.msra.mxu0 0.0
  %1232 = vmatprep.subr.mxu0 0.0
  %1233 = vmatpush2.msra.mxu0 0.0
  %1234 = vmatprep.subr.mxu0 0.0
  %1235 = vmatpush2.msra.mxu0 0.0
  %1236 = vmatprep.subr.mxu0 0.0
  %1237 = vmatpush2.msra.mxu0 0.0
  %1238 = vmatprep.mubr.f32.mxu0 0.0
  %1239 = vmatmul.mubr.f32.gmra.mxu0 %v1172
  %v1240 = vpop.f32.mrf.mxu0
  %v1241 = vadd.f32 0.0, %v1240
  %v1242 = vpop.f32.mrf.mxu0
  %1243 = vdwg.mxu0
  %v1245 = vsel %vm1009, %v1092, 0
  %1247 = vmatprep.subr.mxu0 0.0
  %1248 = vmatpush1.msra.mxu0 0.0
  %1249 = vmatprep.subr.mxu0 0.0
  %1250 = vmatpush1.msra.mxu0 0.0
  %1251 = vmatprep.subr.mxu0 0.0
  %1252 = vmatpush1.msra.mxu0 0.0
  %1253 = vmatprep.subr.mxu0 0.0
  %1254 = vmatpush1.msra.mxu0 0.0
  %1255 = vmatprep.subr.mxu0 0.0
  %1256 = vmatpush1.msra.mxu0 0.0
  %1257 = vmatprep.subr.mxu0 0.0
  %1258 = vmatpush1.msra.mxu0 0.0
  %1259 = vmatprep.subr.mxu0 0.0
  %1260 = vmatpush1.msra.mxu0 0.0
  %1261 = vmatprep.subr.mxu0 0.0
  %1262 = vmatpush1.msra.mxu0 0.0
  %1263 = vmatprep.subr.mxu0 0.0
  %1264 = vmatpush1.msra.mxu0 0.0
  %1265 = vmatprep.subr.mxu0 0.0
  %1266 = vmatpush1.msra.mxu0 0.0
  %1267 = vmatprep.subr.mxu0 0.0
  %1268 = vmatpush1.msra.mxu0 0.0
  %1269 = vmatprep.subr.mxu0 0.0
  %1270 = vmatpush1.msra.mxu0 0.0
  %1271 = vmatprep.subr.mxu0 0.0
  %1272 = vmatpush1.msra.mxu0 0.0
  %1273 = vmatprep.subr.mxu0 0.0
  %1274 = vmatpush1.msra.mxu0 0.0
  %1275 = vmatprep.subr.mxu0 0.0
  %1276 = vmatpush1.msra.mxu0 0.0
  %1277 = vmatprep.subr.mxu0 0.0
  %1278 = vmatpush1.msra.mxu0 %v373
  %1279 = vmatprep.subr.mxu0 0.0
  %1280 = vmatpush2.msra.mxu0 0.0
  %1281 = vmatprep.subr.mxu0 0.0
  %1282 = vmatpush2.msra.mxu0 0.0
  %1283 = vmatprep.subr.mxu0 0.0
  %1284 = vmatpush2.msra.mxu0 0.0
  %1285 = vmatprep.subr.mxu0 0.0
  %1286 = vmatpush2.msra.mxu0 0.0
  %1287 = vmatprep.subr.mxu0 0.0
  %1288 = vmatpush2.msra.mxu0 0.0
  %1289 = vmatprep.subr.mxu0 0.0
  %1290 = vmatpush2.msra.mxu0 0.0
  %1291 = vmatprep.subr.mxu0 0.0
  %1292 = vmatpush2.msra.mxu0 0.0
  %1293 = vmatprep.subr.mxu0 0.0
  %1294 = vmatpush2.msra.mxu0 0.0
  %1295 = vmatprep.subr.mxu0 0.0
  %1296 = vmatpush2.msra.mxu0 0.0
  %1297 = vmatprep.subr.mxu0 0.0
  %1298 = vmatpush2.msra.mxu0 0.0
  %1299 = vmatprep.subr.mxu0 0.0
  %1300 = vmatpush2.msra.mxu0 0.0
  %1301 = vmatprep.subr.mxu0 0.0
  %1302 = vmatpush2.msra.mxu0 0.0
  %1303 = vmatprep.subr.mxu0 0.0
  %1304 = vmatpush2.msra.mxu0 0.0
  %1305 = vmatprep.subr.mxu0 0.0
  %1306 = vmatpush2.msra.mxu0 0.0
  %1307 = vmatprep.subr.mxu0 0.0
  %1308 = vmatpush2.msra.mxu0 0.0
  %1309 = vmatprep.subr.mxu0 0.0
  %1310 = vmatpush2.msra.mxu0 0.0
  %1311 = vmatprep.mubr.f32.mxu0 0.0
  %1312 = vmatmul.mubr.f32.gmra.mxu0 %v1245
  %v1313 = vpop.f32.mrf.mxu0
  %v1314 = vadd.f32 0.0, %v1313
  %v1315 = vpop.f32.mrf.mxu0
  %1316 = vdwg.mxu0
  %v1318 = vsel %vm1009, %v1093, 0
  %1320 = vmatprep.subr.mxu0 0.0
  %1321 = vmatpush1.msra.mxu0 0.0
  %1322 = vmatprep.subr.mxu0 0.0
  %1323 = vmatpush1.msra.mxu0 0.0
  %1324 = vmatprep.subr.mxu0 0.0
  %1325 = vmatpush1.msra.mxu0 0.0
  %1326 = vmatprep.subr.mxu0 0.0
  %1327 = vmatpush1.msra.mxu0 0.0
  %1328 = vmatprep.subr.mxu0 0.0
  %1329 = vmatpush1.msra.mxu0 0.0
  %1330 = vmatprep.subr.mxu0 0.0
  %1331 = vmatpush1.msra.mxu0 0.0
  %1332 = vmatprep.subr.mxu0 0.0
  %1333 = vmatpush1.msra.mxu0 0.0
  %1334 = vmatprep.subr.mxu0 0.0
  %1335 = vmatpush1.msra.mxu0 0.0
  %1336 = vmatprep.subr.mxu0 0.0
  %1337 = vmatpush1.msra.mxu0 0.0
  %1338 = vmatprep.subr.mxu0 0.0
  %1339 = vmatpush1.msra.mxu0 0.0
  %1340 = vmatprep.subr.mxu0 0.0
  %1341 = vmatpush1.msra.mxu0 0.0
  %1342 = vmatprep.subr.mxu0 0.0
  %1343 = vmatpush1.msra.mxu0 0.0
  %1344 = vmatprep.subr.mxu0 0.0
  %1345 = vmatpush1.msra.mxu0 0.0
  %1346 = vmatprep.subr.mxu0 0.0
  %1347 = vmatpush1.msra.mxu0 0.0
  %1348 = vmatprep.subr.mxu0 0.0
  %1349 = vmatpush1.msra.mxu0 0.0
  %1350 = vmatprep.subr.mxu0 0.0
  %1351 = vmatpush1.msra.mxu0 %v378
  %1352 = vmatprep.subr.mxu0 0.0
  %1353 = vmatpush2.msra.mxu0 0.0
  %1354 = vmatprep.subr.mxu0 0.0
  %1355 = vmatpush2.msra.mxu0 0.0
  %1356 = vmatprep.subr.mxu0 0.0
  %1357 = vmatpush2.msra.mxu0 0.0
  %1358 = vmatprep.subr.mxu0 0.0
  %1359 = vmatpush2.msra.mxu0 0.0
  %1360 = vmatprep.subr.mxu0 0.0
  %1361 = vmatpush2.msra.mxu0 0.0
  %1362 = vmatprep.subr.mxu0 0.0
  %1363 = vmatpush2.msra.mxu0 0.0
  %1364 = vmatprep.subr.mxu0 0.0
  %1365 = vmatpush2.msra.mxu0 0.0
  %1366 = vmatprep.subr.mxu0 0.0
  %1367 = vmatpush2.msra.mxu0 0.0
  %1368 = vmatprep.subr.mxu0 0.0
  %1369 = vmatpush2.msra.mxu0 0.0
  %1370 = vmatprep.subr.mxu0 0.0
  %1371 = vmatpush2.msra.mxu0 0.0
  %1372 = vmatprep.subr.mxu0 0.0
  %1373 = vmatpush2.msra.mxu0 0.0
  %1374 = vmatprep.subr.mxu0 0.0
  %1375 = vmatpush2.msra.mxu0 0.0
  %1376 = vmatprep.subr.mxu0 0.0
  %1377 = vmatpush2.msra.mxu0 0.0
  %1378 = vmatprep.subr.mxu0 0.0
  %1379 = vmatpush2.msra.mxu0 0.0
  %1380 = vmatprep.subr.mxu0 0.0
  %1381 = vmatpush2.msra.mxu0 0.0
  %1382 = vmatprep.subr.mxu0 0.0
  %1383 = vmatpush2.msra.mxu0 0.0
  %1384 = vmatprep.mubr.f32.mxu0 0.0
  %1385 = vmatmul.mubr.f32.gmra.mxu0 %v1318
  %v1386 = vpop.f32.mrf.mxu0
  %v1387 = vadd.f32 0.0, %v1386
  %v1388 = vpop.f32.mrf.mxu0
  %1389 = vdwg.mxu0
  %v1391 = vsel %vm1009, %v1094, 0
  %1393 = vmatprep.subr.mxu0 0.0
  %1394 = vmatpush1.msra.mxu0 0.0
  %1395 = vmatprep.subr.mxu0 0.0
  %1396 = vmatpush1.msra.mxu0 0.0
  %1397 = vmatprep.subr.mxu0 0.0
  %1398 = vmatpush1.msra.mxu0 0.0
  %1399 = vmatprep.subr.mxu0 0.0
  %1400 = vmatpush1.msra.mxu0 0.0
  %1401 = vmatprep.subr.mxu0 0.0
  %1402 = vmatpush1.msra.mxu0 0.0
  %1403 = vmatprep.subr.mxu0 0.0
  %1404 = vmatpush1.msra.mxu0 0.0
  %1405 = vmatprep.subr.mxu0 0.0
  %1406 = vmatpush1.msra.mxu0 0.0
  %1407 = vmatprep.subr.mxu0 0.0
  %1408 = vmatpush1.msra.mxu0 0.0
  %1409 = vmatprep.subr.mxu0 0.0
  %1410 = vmatpush1.msra.mxu0 0.0
  %1411 = vmatprep.subr.mxu0 0.0
  %1412 = vmatpush1.msra.mxu0 0.0
  %1413 = vmatprep.subr.mxu0 0.0
  %1414 = vmatpush1.msra.mxu0 0.0
  %1415 = vmatprep.subr.mxu0 0.0
  %1416 = vmatpush1.msra.mxu0 0.0
  %1417 = vmatprep.subr.mxu0 0.0
  %1418 = vmatpush1.msra.mxu0 0.0
  %1419 = vmatprep.subr.mxu0 0.0
  %1420 = vmatpush1.msra.mxu0 0.0
  %1421 = vmatprep.subr.mxu0 0.0
  %1422 = vmatpush1.msra.mxu0 0.0
  %1423 = vmatprep.subr.mxu0 0.0
  %1424 = vmatpush1.msra.mxu0 %v383
  %1425 = vmatprep.subr.mxu0 0.0
  %1426 = vmatpush2.msra.mxu0 0.0
  %1427 = vmatprep.subr.mxu0 0.0
  %1428 = vmatpush2.msra.mxu0 0.0
  %1429 = vmatprep.subr.mxu0 0.0
  %1430 = vmatpush2.msra.mxu0 0.0
  %1431 = vmatprep.subr.mxu0 0.0
  %1432 = vmatpush2.msra.mxu0 0.0
  %1433 = vmatprep.subr.mxu0 0.0
  %1434 = vmatpush2.msra.mxu0 0.0
  %1435 = vmatprep.subr.mxu0 0.0
  %1436 = vmatpush2.msra.mxu0 0.0
  %1437 = vmatprep.subr.mxu0 0.0
  %1438 = vmatpush2.msra.mxu0 0.0
  %1439 = vmatprep.subr.mxu0 0.0
  %1440 = vmatpush2.msra.mxu0 0.0
  %1441 = vmatprep.subr.mxu0 0.0
  %1442 = vmatpush2.msra.mxu0 0.0
  %1443 = vmatprep.subr.mxu0 0.0
  %1444 = vmatpush2.msra.mxu0 0.0
  %1445 = vmatprep.subr.mxu0 0.0
  %1446 = vmatpush2.msra.mxu0 0.0
  %1447 = vmatprep.subr.mxu0 0.0
  %1448 = vmatpush2.msra.mxu0 0.0
  %1449 = vmatprep.subr.mxu0 0.0
  %1450 = vmatpush2.msra.mxu0 0.0
  %1451 = vmatprep.subr.mxu0 0.0
  %1452 = vmatpush2.msra.mxu0 0.0
  %1453 = vmatprep.subr.mxu0 0.0
  %1454 = vmatpush2.msra.mxu0 0.0
  %1455 = vmatprep.subr.mxu0 0.0
  %1456 = vmatpush2.msra.mxu0 0.0
  %1457 = vmatprep.mubr.f32.mxu0 0.0
  %1458 = vmatmul.mubr.f32.gmra.mxu0 %v1391
  %v1459 = vpop.f32.mrf.mxu0
  %v1460 = vadd.f32 0.0, %v1459
  %v1461 = vpop.f32.mrf.mxu0
  %1462 = vdwg.mxu0
  %v1464 = vsel %vm1009, %v1095, 0
  %1466 = vmatprep.subr.mxu0 0.0
  %1467 = vmatpush1.msra.mxu0 0.0
  %1468 = vmatprep.subr.mxu0 0.0
  %1469 = vmatpush1.msra.mxu0 0.0
  %1470 = vmatprep.subr.mxu0 0.0
  %1471 = vmatpush1.msra.mxu0 0.0
  %1472 = vmatprep.subr.mxu0 0.0
  %1473 = vmatpush1.msra.mxu0 0.0
  %1474 = vmatprep.subr.mxu0 0.0
  %1475 = vmatpush1.msra.mxu0 0.0
  %1476 = vmatprep.subr.mxu0 0.0
  %1477 = vmatpush1.msra.mxu0 0.0
  %1478 = vmatprep.subr.mxu0 0.0
  %1479 = vmatpush1.msra.mxu0 0.0
  %1480 = vmatprep.subr.mxu0 0.0
  %1481 = vmatpush1.msra.mxu0 0.0
  %1482 = vmatprep.subr.mxu0 0.0
  %1483 = vmatpush1.msra.mxu0 0.0
  %1484 = vmatprep.subr.mxu0 0.0
  %1485 = vmatpush1.msra.mxu0 0.0
  %1486 = vmatprep.subr.mxu0 0.0
  %1487 = vmatpush1.msra.mxu0 0.0
  %1488 = vmatprep.subr.mxu0 0.0
  %1489 = vmatpush1.msra.mxu0 0.0
  %1490 = vmatprep.subr.mxu0 0.0
  %1491 = vmatpush1.msra.mxu0 0.0
  %1492 = vmatprep.subr.mxu0 0.0
  %1493 = vmatpush1.msra.mxu0 0.0
  %1494 = vmatprep.subr.mxu0 0.0
  %1495 = vmatpush1.msra.mxu0 0.0
  %1496 = vmatprep.subr.mxu0 0.0
  %1497 = vmatpush1.msra.mxu0 %v388
  %1498 = vmatprep.subr.mxu0 0.0
  %1499 = vmatpush2.msra.mxu0 0.0
  %1500 = vmatprep.subr.mxu0 0.0
  %1501 = vmatpush2.msra.mxu0 0.0
  %1502 = vmatprep.subr.mxu0 0.0
  %1503 = vmatpush2.msra.mxu0 0.0
  %1504 = vmatprep.subr.mxu0 0.0
  %1505 = vmatpush2.msra.mxu0 0.0
  %1506 = vmatprep.subr.mxu0 0.0
  %1507 = vmatpush2.msra.mxu0 0.0
  %1508 = vmatprep.subr.mxu0 0.0
  %1509 = vmatpush2.msra.mxu0 0.0
  %1510 = vmatprep.subr.mxu0 0.0
  %1511 = vmatpush2.msra.mxu0 0.0
  %1512 = vmatprep.subr.mxu0 0.0
  %1513 = vmatpush2.msra.mxu0 0.0
  %1514 = vmatprep.subr.mxu0 0.0
  %1515 = vmatpush2.msra.mxu0 0.0
  %1516 = vmatprep.subr.mxu0 0.0
  %1517 = vmatpush2.msra.mxu0 0.0
  %1518 = vmatprep.subr.mxu0 0.0
  %1519 = vmatpush2.msra.mxu0 0.0
  %1520 = vmatprep.subr.mxu0 0.0
  %1521 = vmatpush2.msra.mxu0 0.0
  %1522 = vmatprep.subr.mxu0 0.0
  %1523 = vmatpush2.msra.mxu0 0.0
  %1524 = vmatprep.subr.mxu0 0.0
  %1525 = vmatpush2.msra.mxu0 0.0
  %1526 = vmatprep.subr.mxu0 0.0
  %1527 = vmatpush2.msra.mxu0 0.0
  %1528 = vmatprep.subr.mxu0 0.0
  %1529 = vmatpush2.msra.mxu0 0.0
  %1530 = vmatprep.mubr.f32.mxu0 0.0
  %1531 = vmatmul.mubr.f32.gmra.mxu0 %v1464
  %v1532 = vpop.f32.mrf.mxu0
  %v1533 = vadd.f32 0.0, %v1532
  %v1534 = vpop.f32.mrf.mxu0
  %1535 = vdwg.mxu0
  %v1537 = vsel %vm1009, %v1096, 0
  %1539 = vmatprep.subr.mxu0 0.0
  %1540 = vmatpush1.msra.mxu0 0.0
  %1541 = vmatprep.subr.mxu0 0.0
  %1542 = vmatpush1.msra.mxu0 0.0
  %1543 = vmatprep.subr.mxu0 0.0
  %1544 = vmatpush1.msra.mxu0 0.0
  %1545 = vmatprep.subr.mxu0 0.0
  %1546 = vmatpush1.msra.mxu0 0.0
  %1547 = vmatprep.subr.mxu0 0.0
  %1548 = vmatpush1.msra.mxu0 0.0
  %1549 = vmatprep.subr.mxu0 0.0
  %1550 = vmatpush1.msra.mxu0 0.0
  %1551 = vmatprep.subr.mxu0 0.0
  %1552 = vmatpush1.msra.mxu0 0.0
  %1553 = vmatprep.subr.mxu0 0.0
  %1554 = vmatpush1.msra.mxu0 0.0
  %1555 = vmatprep.subr.mxu0 0.0
  %1556 = vmatpush1.msra.mxu0 0.0
  %1557 = vmatprep.subr.mxu0 0.0
  %1558 = vmatpush1.msra.mxu0 0.0
  %1559 = vmatprep.subr.mxu0 0.0
  %1560 = vmatpush1.msra.mxu0 0.0
  %1561 = vmatprep.subr.mxu0 0.0
  %1562 = vmatpush1.msra.mxu0 0.0
  %1563 = vmatprep.subr.mxu0 0.0
  %1564 = vmatpush1.msra.mxu0 0.0
  %1565 = vmatprep.subr.mxu0 0.0
  %1566 = vmatpush1.msra.mxu0 0.0
  %1567 = vmatprep.subr.mxu0 0.0
  %1568 = vmatpush1.msra.mxu0 0.0
  %1569 = vmatprep.subr.mxu0 0.0
  %1570 = vmatpush1.msra.mxu0 %v393
  %1571 = vmatprep.subr.mxu0 0.0
  %1572 = vmatpush2.msra.mxu0 0.0
  %1573 = vmatprep.subr.mxu0 0.0
  %1574 = vmatpush2.msra.mxu0 0.0
  %1575 = vmatprep.subr.mxu0 0.0
  %1576 = vmatpush2.msra.mxu0 0.0
  %1577 = vmatprep.subr.mxu0 0.0
  %1578 = vmatpush2.msra.mxu0 0.0
  %1579 = vmatprep.subr.mxu0 0.0
  %1580 = vmatpush2.msra.mxu0 0.0
  %1581 = vmatprep.subr.mxu0 0.0
  %1582 = vmatpush2.msra.mxu0 0.0
  %1583 = vmatprep.subr.mxu0 0.0
  %1584 = vmatpush2.msra.mxu0 0.0
  %1585 = vmatprep.subr.mxu0 0.0
  %1586 = vmatpush2.msra.mxu0 0.0
  %1587 = vmatprep.subr.mxu0 0.0
  %1588 = vmatpush2.msra.mxu0 0.0
  %1589 = vmatprep.subr.mxu0 0.0
  %1590 = vmatpush2.msra.mxu0 0.0
  %1591 = vmatprep.subr.mxu0 0.0
  %1592 = vmatpush2.msra.mxu0 0.0
  %1593 = vmatprep.subr.mxu0 0.0
  %1594 = vmatpush2.msra.mxu0 0.0
  %1595 = vmatprep.subr.mxu0 0.0
  %1596 = vmatpush2.msra.mxu0 0.0
  %1597 = vmatprep.subr.mxu0 0.0
  %1598 = vmatpush2.msra.mxu0 0.0
  %1599 = vmatprep.subr.mxu0 0.0
  %1600 = vmatpush2.msra.mxu0 0.0
  %1601 = vmatprep.subr.mxu0 0.0
  %1602 = vmatpush2.msra.mxu0 0.0
  %1603 = vmatprep.mubr.f32.mxu0 0.0
  %1604 = vmatmul.mubr.f32.gmra.mxu0 %v1537
  %v1605 = vpop.f32.mrf.mxu0
  %v1606 = vadd.f32 0.0, %v1605
  %v1607 = vpop.f32.mrf.mxu0
  %1608 = vdwg.mxu0
  %v1610 = vsel %vm1009, %v1097, 0
  %1612 = vmatprep.subr.mxu0 0.0
  %1613 = vmatpush1.msra.mxu0 0.0
  %1614 = vmatprep.subr.mxu0 0.0
  %1615 = vmatpush1.msra.mxu0 0.0
  %1616 = vmatprep.subr.mxu0 0.0
  %1617 = vmatpush1.msra.mxu0 0.0
  %1618 = vmatprep.subr.mxu0 0.0
  %1619 = vmatpush1.msra.mxu0 0.0
  %1620 = vmatprep.subr.mxu0 0.0
  %1621 = vmatpush1.msra.mxu0 0.0
  %1622 = vmatprep.subr.mxu0 0.0
  %1623 = vmatpush1.msra.mxu0 0.0
  %1624 = vmatprep.subr.mxu0 0.0
  %1625 = vmatpush1.msra.mxu0 0.0
  %1626 = vmatprep.subr.mxu0 0.0
  %1627 = vmatpush1.msra.mxu0 0.0
  %1628 = vmatprep.subr.mxu0 0.0
  %1629 = vmatpush1.msra.mxu0 0.0
  %1630 = vmatprep.subr.mxu0 0.0
  %1631 = vmatpush1.msra.mxu0 0.0
  %1632 = vmatprep.subr.mxu0 0.0
  %1633 = vmatpush1.msra.mxu0 0.0
  %1634 = vmatprep.subr.mxu0 0.0
  %1635 = vmatpush1.msra.mxu0 0.0
  %1636 = vmatprep.subr.mxu0 0.0
  %1637 = vmatpush1.msra.mxu0 0.0
  %1638 = vmatprep.subr.mxu0 0.0
  %1639 = vmatpush1.msra.mxu0 0.0
  %1640 = vmatprep.subr.mxu0 0.0
  %1641 = vmatpush1.msra.mxu0 0.0
  %1642 = vmatprep.subr.mxu0 0.0
  %1643 = vmatpush1.msra.mxu0 %v398
  %1644 = vmatprep.subr.mxu0 0.0
  %1645 = vmatpush2.msra.mxu0 0.0
  %1646 = vmatprep.subr.mxu0 0.0
  %1647 = vmatpush2.msra.mxu0 0.0
  %1648 = vmatprep.subr.mxu0 0.0
  %1649 = vmatpush2.msra.mxu0 0.0
  %1650 = vmatprep.subr.mxu0 0.0
  %1651 = vmatpush2.msra.mxu0 0.0
  %1652 = vmatprep.subr.mxu0 0.0
  %1653 = vmatpush2.msra.mxu0 0.0
  %1654 = vmatprep.subr.mxu0 0.0
  %1655 = vmatpush2.msra.mxu0 0.0
  %1656 = vmatprep.subr.mxu0 0.0
  %1657 = vmatpush2.msra.mxu0 0.0
  %1658 = vmatprep.subr.mxu0 0.0
  %1659 = vmatpush2.msra.mxu0 0.0
  %1660 = vmatprep.subr.mxu0 0.0
  %1661 = vmatpush2.msra.mxu0 0.0
  %1662 = vmatprep.subr.mxu0 0.0
  %1663 = vmatpush2.msra.mxu0 0.0
  %1664 = vmatprep.subr.mxu0 0.0
  %1665 = vmatpush2.msra.mxu0 0.0
  %1666 = vmatprep.subr.mxu0 0.0
  %1667 = vmatpush2.msra.mxu0 0.0
  %1668 = vmatprep.subr.mxu0 0.0
  %1669 = vmatpush2.msra.mxu0 0.0
  %1670 = vmatprep.subr.mxu0 0.0
  %1671 = vmatpush2.msra.mxu0 0.0
  %1672 = vmatprep.subr.mxu0 0.0
  %1673 = vmatpush2.msra.mxu0 0.0
  %1674 = vmatprep.subr.mxu0 0.0
  %1675 = vmatpush2.msra.mxu0 0.0
  %1676 = vmatprep.mubr.f32.mxu0 0.0
  %1677 = vmatmul.mubr.f32.gmra.mxu0 %v1610
  %v1678 = vpop.f32.mrf.mxu0
  %v1679 = vadd.f32 0.0, %v1678
  %v1680 = vpop.f32.mrf.mxu0
  %1681 = vdwg.mxu0
  %v1682 = vadd.f32 %v41, %v1168
  %v1683 = vadd.f32 %v42, %v1241
  %v1684 = vadd.f32 %v43, %v1314
  %v1685 = vadd.f32 %v44, %v1387
  %v1686 = vadd.f32 %v45, %v1460
  %v1687 = vadd.f32 %v46, %v1533
  %v1688 = vadd.f32 %v47, %v1606
  %v1689 = vadd.f32 %v48, %v1679
  %v1690 = vsel %vm53, %v1682, 0.0
  %1691 = vadd.xlane.f32.xlu0 %v1690
  %v1692 = vpop.xlane.xlu0 %1691
  %v1693 = vsel %vm53, %v1683, 0.0
  %1694 = vadd.xlane.f32.xlu0 %v1693
  %v1695 = vpop.xlane.xlu0 %1694
  %v1696 = vsel %vm53, %v1684, 0.0
  %1697 = vadd.xlane.f32.xlu0 %v1696
  %v1698 = vpop.xlane.xlu0 %1697
  %v1699 = vsel %vm53, %v1685, 0.0
  %1700 = vadd.xlane.f32.xlu0 %v1699
  %v1701 = vpop.xlane.xlu0 %1700
  %v1702 = vsel %vm53, %v1686, 0.0
  %1703 = vadd.xlane.f32.xlu0 %v1702
  %v1704 = vpop.xlane.xlu0 %1703
  %v1705 = vsel %vm53, %v1687, 0.0
  %1706 = vadd.xlane.f32.xlu0 %v1705
  %v1707 = vpop.xlane.xlu0 %1706
  %v1708 = vsel %vm53, %v1688, 0.0
  %1709 = vadd.xlane.f32.xlu0 %v1708
  %v1710 = vpop.xlane.xlu0 %1709
  %v1711 = vsel %vm53, %v1689, 0.0
  %1712 = vadd.xlane.f32.xlu0 %v1711
  %v1713 = vpop.xlane.xlu0 %1712
  %v1714 = vrcp.pop 32.0
  %v1715 = vmul.f32 %v1692, %v1714
  %v1716 = vmul.f32 %v1695, %v1714
  %v1717 = vmul.f32 %v1698, %v1714
  %v1718 = vmul.f32 %v1701, %v1714
  %v1719 = vmul.f32 %v1704, %v1714
  %v1720 = vmul.f32 %v1707, %v1714
  %v1721 = vmul.f32 %v1710, %v1714
  %v1722 = vmul.f32 %v1713, %v1714
  %v1723 = vsub.f32 %v1682, %v1715
  %v1724 = vsub.f32 %v1683, %v1716
  %v1725 = vsub.f32 %v1684, %v1717
  %v1726 = vsub.f32 %v1685, %v1718
  %v1727 = vsub.f32 %v1686, %v1719
  %v1728 = vsub.f32 %v1687, %v1720
  %v1729 = vsub.f32 %v1688, %v1721
  %v1730 = vsub.f32 %v1689, %v1722
  %v1731 = vmul.f32 %v1723, %v1723
  %v1732 = vmul.f32 %v1724, %v1724
  %v1733 = vmul.f32 %v1725, %v1725
  %v1734 = vmul.f32 %v1726, %v1726
  %v1735 = vmul.f32 %v1727, %v1727
  %v1736 = vmul.f32 %v1728, %v1728
  %v1737 = vmul.f32 %v1729, %v1729
  %v1738 = vmul.f32 %v1730, %v1730
  %v1739 = vsel %vm53, %v1731, 0.0
  %1740 = vadd.xlane.f32.xlu0 %v1739
  %v1741 = vpop.xlane.xlu0 %1740
  %v1742 = vsel %vm53, %v1732, 0.0
  %1743 = vadd.xlane.f32.xlu0 %v1742
  %v1744 = vpop.xlane.xlu0 %1743
  %v1745 = vsel %vm53, %v1733, 0.0
  %1746 = vadd.xlane.f32.xlu0 %v1745
  %v1747 = vpop.xlane.xlu0 %1746
  %v1748 = vsel %vm53, %v1734, 0.0
  %1749 = vadd.xlane.f32.xlu0 %v1748
  %v1750 = vpop.xlane.xlu0 %1749
  %v1751 = vsel %vm53, %v1735, 0.0
  %1752 = vadd.xlane.f32.xlu0 %v1751
  %v1753 = vpop.xlane.xlu0 %1752
  %v1754 = vsel %vm53, %v1736, 0.0
  %1755 = vadd.xlane.f32.xlu0 %v1754
  %v1756 = vpop.xlane.xlu0 %1755
  %v1757 = vsel %vm53, %v1737, 0.0
  %1758 = vadd.xlane.f32.xlu0 %v1757
  %v1759 = vpop.xlane.xlu0 %1758
  %v1760 = vsel %vm53, %v1738, 0.0
  %1761 = vadd.xlane.f32.xlu0 %v1760
  %v1762 = vpop.xlane.xlu0 %1761
  %v1763 = vmul.f32 %v1741, %v1714
  %v1764 = vmul.f32 %v1744, %v1714
  %v1765 = vmul.f32 %v1747, %v1714
  %v1766 = vmul.f32 %v1750, %v1714
  %v1767 = vmul.f32 %v1753, %v1714
  %v1768 = vmul.f32 %v1756, %v1714
  %v1769 = vmul.f32 %v1759, %v1714
  %v1770 = vmul.f32 %v1762, %v1714
  %v1771 = vadd.f32 %v1763, 1e-05
  %v1772 = vadd.f32 %v1764, 1e-05
  %v1773 = vadd.f32 %v1765, 1e-05
  %v1774 = vadd.f32 %v1766, 1e-05
  %v1775 = vadd.f32 %v1767, 1e-05
  %v1776 = vadd.f32 %v1768, 1e-05
  %v1777 = vadd.f32 %v1769, 1e-05
  %v1778 = vadd.f32 %v1770, 1e-05
  %v1779 = vrsqrt.pop %v1771
  %v1780 = vrsqrt.pop %v1772
  %v1781 = vrsqrt.pop %v1773
  %v1782 = vrsqrt.pop %v1774
  %v1783 = vrsqrt.pop %v1775
  %v1784 = vrsqrt.pop %v1776
  %v1785 = vrsqrt.pop %v1777
  %v1786 = vrsqrt.pop %v1778
  %v1787 = vmul.f32 %v1723, %v1779
  %v1788 = vmul.f32 %v1724, %v1780
  %v1789 = vmul.f32 %v1725, %v1781
  %v1790 = vmul.f32 %v1726, %v1782
  %v1791 = vmul.f32 %v1727, %v1783
  %v1792 = vmul.f32 %v1728, %v1784
  %v1793 = vmul.f32 %v1729, %v1785
  %v1794 = vmul.f32 %v1730, %v1786
  %v1795 = vld [vmem:[%s4] sm:$0x1]
  %v1797 = vlaneseq
  %v1798 = vshrl.u32 %v1797, 7
  %v1799 = vsub.s32 0, %v1798
  %v1800 = vrot.slane %v1795, %v1799
  %v1802 = vmul.f32 %v1787, %v1800
  %v1803 = vmul.f32 %v1788, %v1800
  %v1804 = vmul.f32 %v1789, %v1800
  %v1805 = vmul.f32 %v1790, %v1800
  %v1806 = vmul.f32 %v1791, %v1800
  %v1807 = vmul.f32 %v1792, %v1800
  %v1808 = vmul.f32 %v1793, %v1800
  %v1809 = vmul.f32 %v1794, %v1800
  %v1810 = vld [vmem:[%s5] sm:$0x1]
  %v1812 = vlaneseq
  %v1813 = vshrl.u32 %v1812, 7
  %v1814 = vsub.s32 0, %v1813
  %v1815 = vrot.slane %v1810, %v1814
  %v1817 = vadd.f32 %v1802, %v1815
  %v1818 = vadd.f32 %v1803, %v1815
  %v1819 = vadd.f32 %v1804, %v1815
  %v1820 = vadd.f32 %v1805, %v1815
  %v1821 = vadd.f32 %v1806, %v1815
  %v1822 = vadd.f32 %v1807, %v1815
  %v1823 = vadd.f32 %v1808, %v1815
  %v1824 = vadd.f32 %v1809, %v1815
  %v1825 = vld [vmem:[%s6] sm:$0xff]
  %v1826 = vld [vmem:[%s6 + $0x8] sm:$0xff]
  %v1827 = vld [vmem:[%s6 + $0x10] sm:$0xff]
  %v1828 = vld [vmem:[%s6 + $0x18] sm:$0xff]
  %v1829 = vld [vmem:[%s7] sm:$0x1]
  %v1831 = vlaneseq
  %v1832 = vshrl.u32 %v1831, 7
  %v1833 = vsub.s32 0, %v1832
  %v1834 = vrot.slane %v1829, %v1833
  %v1837 = vsel %vm53, %v1817, 0
  %v1840 = vsel %vm53, %v1818, 0
  %v1843 = vsel %vm53, %v1819, 0
  %v1846 = vsel %vm53, %v1820, 0
  %v1849 = vsel %vm53, %v1821, 0
  %v1852 = vsel %vm53, %v1822, 0
  %v1855 = vsel %vm53, %v1823, 0
  %v1858 = vsel %vm53, %v1824, 0
  %1860 = vmatprep.subr.mxu0 0.0
  %1861 = vmatpush1.msra.mxu0 0.0
  %1862 = vmatprep.subr.mxu0 0.0
  %1863 = vmatpush1.msra.mxu0 0.0
  %1864 = vmatprep.subr.mxu0 0.0
  %1865 = vmatpush1.msra.mxu0 0.0
  %1866 = vmatprep.subr.mxu0 0.0
  %1867 = vmatpush1.msra.mxu0 0.0
  %1868 = vmatprep.subr.mxu0 0.0
  %1869 = vmatpush1.msra.mxu0 0.0
  %1870 = vmatprep.subr.mxu0 0.0
  %1871 = vmatpush1.msra.mxu0 0.0
  %1872 = vmatprep.subr.mxu0 0.0
  %1873 = vmatpush1.msra.mxu0 0.0
  %1874 = vmatprep.subr.mxu0 0.0
  %1875 = vmatpush1.msra.mxu0 0.0
  %1876 = vmatprep.subr.mxu0 0.0
  %1877 = vmatpush1.msra.mxu0 0.0
  %1878 = vmatprep.subr.mxu0 0.0
  %1879 = vmatpush1.msra.mxu0 0.0
  %1880 = vmatprep.subr.mxu0 0.0
  %1881 = vmatpush1.msra.mxu0 0.0
  %1882 = vmatprep.subr.mxu0 0.0
  %1883 = vmatpush1.msra.mxu0 0.0
  %1884 = vmatprep.subr.mxu0 0.0
  %1885 = vmatpush1.msra.mxu0 %v1828
  %1886 = vmatprep.subr.mxu0 0.0
  %1887 = vmatpush1.msra.mxu0 %v1827
  %1888 = vmatprep.subr.mxu0 0.0
  %1889 = vmatpush1.msra.mxu0 %v1826
  %1890 = vmatprep.subr.mxu0 0.0
  %1891 = vmatpush1.msra.mxu0 %v1825
  %1892 = vmatprep.subr.mxu0 0.0
  %1893 = vmatpush2.msra.mxu0 0.0
  %1894 = vmatprep.subr.mxu0 0.0
  %1895 = vmatpush2.msra.mxu0 0.0
  %1896 = vmatprep.subr.mxu0 0.0
  %1897 = vmatpush2.msra.mxu0 0.0
  %1898 = vmatprep.subr.mxu0 0.0
  %1899 = vmatpush2.msra.mxu0 0.0
  %1900 = vmatprep.subr.mxu0 0.0
  %1901 = vmatpush2.msra.mxu0 0.0
  %1902 = vmatprep.subr.mxu0 0.0
  %1903 = vmatpush2.msra.mxu0 0.0
  %1904 = vmatprep.subr.mxu0 0.0
  %1905 = vmatpush2.msra.mxu0 0.0
  %1906 = vmatprep.subr.mxu0 0.0
  %1907 = vmatpush2.msra.mxu0 0.0
  %1908 = vmatprep.subr.mxu0 0.0
  %1909 = vmatpush2.msra.mxu0 0.0
  %1910 = vmatprep.subr.mxu0 0.0
  %1911 = vmatpush2.msra.mxu0 0.0
  %1912 = vmatprep.subr.mxu0 0.0
  %1913 = vmatpush2.msra.mxu0 0.0
  %1914 = vmatprep.subr.mxu0 0.0
  %1915 = vmatpush2.msra.mxu0 0.0
  %1916 = vmatprep.subr.mxu0 0.0
  %1917 = vmatpush2.msra.mxu0 0.0
  %1918 = vmatprep.subr.mxu0 0.0
  %1919 = vmatpush2.msra.mxu0 0.0
  %1920 = vmatprep.subr.mxu0 0.0
  %1921 = vmatpush2.msra.mxu0 0.0
  %1922 = vmatprep.subr.mxu0 0.0
  %1923 = vmatpush2.msra.mxu0 0.0
  %1924 = vmatprep.mubr.f32.mxu0 0.0
  %1925 = vmatmul.mubr.f32.gmra.mxu0 %v1837
  %v1926 = vpop.f32.mrf.mxu0
  %v1927 = vadd.f32 %v1834, %v1926
  %v1928 = vpop.f32.mrf.mxu0
  %1929 = vmatprep.mubr.f32.mxu0 0.0
  %1930 = vmatmul.mubr.f32.gmra.mxu0 %v1840
  %v1931 = vpop.f32.mrf.mxu0
  %v1932 = vadd.f32 %v1834, %v1931
  %v1933 = vpop.f32.mrf.mxu0
  %1934 = vmatprep.mubr.f32.mxu0 0.0
  %1935 = vmatmul.mubr.f32.gmra.mxu0 %v1843
  %v1936 = vpop.f32.mrf.mxu0
  %v1937 = vadd.f32 %v1834, %v1936
  %v1938 = vpop.f32.mrf.mxu0
  %1939 = vmatprep.mubr.f32.mxu0 0.0
  %1940 = vmatmul.mubr.f32.gmra.mxu0 %v1846
  %v1941 = vpop.f32.mrf.mxu0
  %v1942 = vadd.f32 %v1834, %v1941
  %v1943 = vpop.f32.mrf.mxu0
  %1944 = vmatprep.mubr.f32.mxu0 0.0
  %1945 = vmatmul.mubr.f32.gmra.mxu0 %v1849
  %v1946 = vpop.f32.mrf.mxu0
  %v1947 = vadd.f32 %v1834, %v1946
  %v1948 = vpop.f32.mrf.mxu0
  %1949 = vmatprep.mubr.f32.mxu0 0.0
  %1950 = vmatmul.mubr.f32.gmra.mxu0 %v1852
  %v1951 = vpop.f32.mrf.mxu0
  %v1952 = vadd.f32 %v1834, %v1951
  %v1953 = vpop.f32.mrf.mxu0
  %1954 = vmatprep.mubr.f32.mxu0 0.0
  %1955 = vmatmul.mubr.f32.gmra.mxu0 %v1855
  %v1956 = vpop.f32.mrf.mxu0
  %v1957 = vadd.f32 %v1834, %v1956
  %v1958 = vpop.f32.mrf.mxu0
  %1959 = vmatprep.mubr.f32.mxu0 0.0
  %1960 = vmatmul.mubr.f32.gmra.mxu0 %v1858
  %v1961 = vpop.f32.mrf.mxu0
  %v1962 = vadd.f32 %v1834, %v1961
  %v1963 = vpop.f32.mrf.mxu0
  %1964 = vdwg.mxu0
  %v1965 = vmax.f32 %v1927, 0.0
  %v1966 = vmax.f32 %v1932, 0.0
  %v1967 = vmax.f32 %v1937, 0.0
  %v1968 = vmax.f32 %v1942, 0.0
  %v1969 = vmax.f32 %v1947, 0.0
  %v1970 = vmax.f32 %v1952, 0.0
  %v1971 = vmax.f32 %v1957, 0.0
  %v1972 = vmax.f32 %v1962, 0.0
  %v1973 = vld [vmem:[%s8] sm:$0xff]
  %v1974 = vld [vmem:[%s8 + $0x8] sm:$0xff]
  %v1975 = vld [vmem:[%s8 + $0x10] sm:$0xff]
  %v1976 = vld [vmem:[%s8 + $0x18] sm:$0xff]
  %v1977 = vld [vmem:[%s8 + $0x20] sm:$0xff]
  %v1978 = vld [vmem:[%s8 + $0x28] sm:$0xff]
  %v1979 = vld [vmem:[%s8 + $0x30] sm:$0xff]
  %v1980 = vld [vmem:[%s8 + $0x38] sm:$0xff]
  %v1981 = vld [vmem:[%s9] sm:$0x1]
  %v1983 = vlaneseq
  %v1984 = vshrl.u32 %v1983, 7
  %v1985 = vsub.s32 0, %v1984
  %v1986 = vrot.slane %v1981, %v1985
  %vm1988 = vcmask 523264
  %v1990 = vsel %vm1988, %v1965, 0
  %v1993 = vsel %vm1988, %v1966, 0
  %v1996 = vsel %vm1988, %v1967, 0
  %v1999 = vsel %vm1988, %v1968, 0
  %v2002 = vsel %vm1988, %v1969, 0
  %v2005 = vsel %vm1988, %v1970, 0
  %v2008 = vsel %vm1988, %v1971, 0
  %v2011 = vsel %vm1988, %v1972, 0
  %2013 = vmatprep.subr.mxu0 0.0
  %2014 = vmatpush1.msra.mxu0 0.0
  %2015 = vmatprep.subr.mxu0 0.0
  %2016 = vmatpush1.msra.mxu0 0.0
  %2017 = vmatprep.subr.mxu0 0.0
  %2018 = vmatpush1.msra.mxu0 0.0
  %2019 = vmatprep.subr.mxu0 0.0
  %2020 = vmatpush1.msra.mxu0 0.0
  %2021 = vmatprep.subr.mxu0 0.0
  %2022 = vmatpush1.msra.mxu0 0.0
  %2023 = vmatprep.subr.mxu0 0.0
  %2024 = vmatpush1.msra.mxu0 0.0
  %2025 = vmatprep.subr.mxu0 0.0
  %2026 = vmatpush1.msra.mxu0 0.0
  %2027 = vmatprep.subr.mxu0 0.0
  %2028 = vmatpush1.msra.mxu0 0.0
  %2029 = vmatprep.subr.mxu0 0.0
  %2030 = vmatpush1.msra.mxu0 %v1980
  %2031 = vmatprep.subr.mxu0 0.0
  %2032 = vmatpush1.msra.mxu0 %v1979
  %2033 = vmatprep.subr.mxu0 0.0
  %2034 = vmatpush1.msra.mxu0 %v1978
  %2035 = vmatprep.subr.mxu0 0.0
  %2036 = vmatpush1.msra.mxu0 %v1977
  %2037 = vmatprep.subr.mxu0 0.0
  %2038 = vmatpush1.msra.mxu0 %v1976
  %2039 = vmatprep.subr.mxu0 0.0
  %2040 = vmatpush1.msra.mxu0 %v1975
  %2041 = vmatprep.subr.mxu0 0.0
  %2042 = vmatpush1.msra.mxu0 %v1974
  %2043 = vmatprep.subr.mxu0 0.0
  %2044 = vmatpush1.msra.mxu0 %v1973
  %2045 = vmatprep.subr.mxu0 0.0
  %2046 = vmatpush2.msra.mxu0 0.0
  %2047 = vmatprep.subr.mxu0 0.0
  %2048 = vmatpush2.msra.mxu0 0.0
  %2049 = vmatprep.subr.mxu0 0.0
  %2050 = vmatpush2.msra.mxu0 0.0
  %2051 = vmatprep.subr.mxu0 0.0
  %2052 = vmatpush2.msra.mxu0 0.0
  %2053 = vmatprep.subr.mxu0 0.0
  %2054 = vmatpush2.msra.mxu0 0.0
  %2055 = vmatprep.subr.mxu0 0.0
  %2056 = vmatpush2.msra.mxu0 0.0
  %2057 = vmatprep.subr.mxu0 0.0
  %2058 = vmatpush2.msra.mxu0 0.0
  %2059 = vmatprep.subr.mxu0 0.0
  %2060 = vmatpush2.msra.mxu0 0.0
  %2061 = vmatprep.subr.mxu0 0.0
  %2062 = vmatpush2.msra.mxu0 0.0
  %2063 = vmatprep.subr.mxu0 0.0
  %2064 = vmatpush2.msra.mxu0 0.0
  %2065 = vmatprep.subr.mxu0 0.0
  %2066 = vmatpush2.msra.mxu0 0.0
  %2067 = vmatprep.subr.mxu0 0.0
  %2068 = vmatpush2.msra.mxu0 0.0
  %2069 = vmatprep.subr.mxu0 0.0
  %2070 = vmatpush2.msra.mxu0 0.0
  %2071 = vmatprep.subr.mxu0 0.0
  %2072 = vmatpush2.msra.mxu0 0.0
  %2073 = vmatprep.subr.mxu0 0.0
  %2074 = vmatpush2.msra.mxu0 0.0
  %2075 = vmatprep.subr.mxu0 0.0
  %2076 = vmatpush2.msra.mxu0 0.0
  %2077 = vmatprep.mubr.f32.mxu0 0.0
  %2078 = vmatmul.mubr.f32.gmra.mxu0 %v1990
  %v2079 = vpop.f32.mrf.mxu0
  %v2080 = vadd.f32 %v1986, %v2079
  %v2081 = vpop.f32.mrf.mxu0
  %2082 = vmatprep.mubr.f32.mxu0 0.0
  %2083 = vmatmul.mubr.f32.gmra.mxu0 %v1993
  %v2084 = vpop.f32.mrf.mxu0
  %v2085 = vadd.f32 %v1986, %v2084
  %v2086 = vpop.f32.mrf.mxu0
  %2087 = vmatprep.mubr.f32.mxu0 0.0
  %2088 = vmatmul.mubr.f32.gmra.mxu0 %v1996
  %v2089 = vpop.f32.mrf.mxu0
  %v2090 = vadd.f32 %v1986, %v2089
  %v2091 = vpop.f32.mrf.mxu0
  %2092 = vmatprep.mubr.f32.mxu0 0.0
  %2093 = vmatmul.mubr.f32.gmra.mxu0 %v1999
  %v2094 = vpop.f32.mrf.mxu0
  %v2095 = vadd.f32 %v1986, %v2094
  %v2096 = vpop.f32.mrf.mxu0
  %2097 = vmatprep.mubr.f32.mxu0 0.0
  %2098 = vmatmul.mubr.f32.gmra.mxu0 %v2002
  %v2099 = vpop.f32.mrf.mxu0
  %v2100 = vadd.f32 %v1986, %v2099
  %v2101 = vpop.f32.mrf.mxu0
  %2102 = vmatprep.mubr.f32.mxu0 0.0
  %2103 = vmatmul.mubr.f32.gmra.mxu0 %v2005
  %v2104 = vpop.f32.mrf.mxu0
  %v2105 = vadd.f32 %v1986, %v2104
  %v2106 = vpop.f32.mrf.mxu0
  %2107 = vmatprep.mubr.f32.mxu0 0.0
  %2108 = vmatmul.mubr.f32.gmra.mxu0 %v2008
  %v2109 = vpop.f32.mrf.mxu0
  %v2110 = vadd.f32 %v1986, %v2109
  %v2111 = vpop.f32.mrf.mxu0
  %2112 = vmatprep.mubr.f32.mxu0 0.0
  %2113 = vmatmul.mubr.f32.gmra.mxu0 %v2011
  %v2114 = vpop.f32.mrf.mxu0
  %v2115 = vadd.f32 %v1986, %v2114
  %v2116 = vpop.f32.mrf.mxu0
  %2117 = vdwg.mxu0
  %v2118 = vadd.f32 %v1817, %v2080
  %v2119 = vadd.f32 %v1818, %v2085
  %v2120 = vadd.f32 %v1819, %v2090
  %v2121 = vadd.f32 %v1820, %v2095
  %v2122 = vadd.f32 %v1821, %v2100
  %v2123 = vadd.f32 %v1822, %v2105
  %v2124 = vadd.f32 %v1823, %v2110
  %v2125 = vadd.f32 %v1824, %v2115
  %v2126 = vsel %vm53, %v2118, 0.0
  %2127 = vadd.xlane.f32.xlu0 %v2126
  %v2128 = vpop.xlane.xlu0 %2127
  %v2129 = vsel %vm53, %v2119, 0.0
  %2130 = vadd.xlane.f32.xlu0 %v2129
  %v2131 = vpop.xlane.xlu0 %2130
  %v2132 = vsel %vm53, %v2120, 0.0
  %2133 = vadd.xlane.f32.xlu0 %v2132
  %v2134 = vpop.xlane.xlu0 %2133
  %v2135 = vsel %vm53, %v2121, 0.0
  %2136 = vadd.xlane.f32.xlu0 %v2135
  %v2137 = vpop.xlane.xlu0 %2136
  %v2138 = vsel %vm53, %v2122, 0.0
  %2139 = vadd.xlane.f32.xlu0 %v2138
  %v2140 = vpop.xlane.xlu0 %2139
  %v2141 = vsel %vm53, %v2123, 0.0
  %2142 = vadd.xlane.f32.xlu0 %v2141
  %v2143 = vpop.xlane.xlu0 %2142
  %v2144 = vsel %vm53, %v2124, 0.0
  %2145 = vadd.xlane.f32.xlu0 %v2144
  %v2146 = vpop.xlane.xlu0 %2145
  %v2147 = vsel %vm53, %v2125, 0.0
  %2148 = vadd.xlane.f32.xlu0 %v2147
  %v2149 = vpop.xlane.xlu0 %2148
  %v2150 = vmul.f32 %v2128, %v1714
  %v2151 = vmul.f32 %v2131, %v1714
  %v2152 = vmul.f32 %v2134, %v1714
  %v2153 = vmul.f32 %v2137, %v1714
  %v2154 = vmul.f32 %v2140, %v1714
  %v2155 = vmul.f32 %v2143, %v1714
  %v2156 = vmul.f32 %v2146, %v1714
  %v2157 = vmul.f32 %v2149, %v1714
  %v2158 = vsub.f32 %v2118, %v2150
  %v2159 = vsub.f32 %v2119, %v2151
  %v2160 = vsub.f32 %v2120, %v2152
  %v2161 = vsub.f32 %v2121, %v2153
  %v2162 = vsub.f32 %v2122, %v2154
  %v2163 = vsub.f32 %v2123, %v2155
  %v2164 = vsub.f32 %v2124, %v2156
  %v2165 = vsub.f32 %v2125, %v2157
  %v2166 = vmul.f32 %v2158, %v2158
  %v2167 = vmul.f32 %v2159, %v2159
  %v2168 = vmul.f32 %v2160, %v2160
  %v2169 = vmul.f32 %v2161, %v2161
  %v2170 = vmul.f32 %v2162, %v2162
  %v2171 = vmul.f32 %v2163, %v2163
  %v2172 = vmul.f32 %v2164, %v2164
  %v2173 = vmul.f32 %v2165, %v2165
  %v2174 = vsel %vm53, %v2166, 0.0
  %2175 = vadd.xlane.f32.xlu0 %v2174
  %v2176 = vpop.xlane.xlu0 %2175
  %v2177 = vsel %vm53, %v2167, 0.0
  %2178 = vadd.xlane.f32.xlu0 %v2177
  %v2179 = vpop.xlane.xlu0 %2178
  %v2180 = vsel %vm53, %v2168, 0.0
  %2181 = vadd.xlane.f32.xlu0 %v2180
  %v2182 = vpop.xlane.xlu0 %2181
  %v2183 = vsel %vm53, %v2169, 0.0
  %2184 = vadd.xlane.f32.xlu0 %v2183
  %v2185 = vpop.xlane.xlu0 %2184
  %v2186 = vsel %vm53, %v2170, 0.0
  %2187 = vadd.xlane.f32.xlu0 %v2186
  %v2188 = vpop.xlane.xlu0 %2187
  %v2189 = vsel %vm53, %v2171, 0.0
  %2190 = vadd.xlane.f32.xlu0 %v2189
  %v2191 = vpop.xlane.xlu0 %2190
  %v2192 = vsel %vm53, %v2172, 0.0
  %2193 = vadd.xlane.f32.xlu0 %v2192
  %v2194 = vpop.xlane.xlu0 %2193
  %v2195 = vsel %vm53, %v2173, 0.0
  %2196 = vadd.xlane.f32.xlu0 %v2195
  %v2197 = vpop.xlane.xlu0 %2196
  %v2198 = vmul.f32 %v2176, %v1714
  %v2199 = vmul.f32 %v2179, %v1714
  %v2200 = vmul.f32 %v2182, %v1714
  %v2201 = vmul.f32 %v2185, %v1714
  %v2202 = vmul.f32 %v2188, %v1714
  %v2203 = vmul.f32 %v2191, %v1714
  %v2204 = vmul.f32 %v2194, %v1714
  %v2205 = vmul.f32 %v2197, %v1714
  %v2206 = vadd.f32 %v2198, 1e-05
  %v2207 = vadd.f32 %v2199, 1e-05
  %v2208 = vadd.f32 %v2200, 1e-05
  %v2209 = vadd.f32 %v2201, 1e-05
  %v2210 = vadd.f32 %v2202, 1e-05
  %v2211 = vadd.f32 %v2203, 1e-05
  %v2212 = vadd.f32 %v2204, 1e-05
  %v2213 = vadd.f32 %v2205, 1e-05
  %v2214 = vrsqrt.pop %v2206
  %v2215 = vrsqrt.pop %v2207
  %v2216 = vrsqrt.pop %v2208
  %v2217 = vrsqrt.pop %v2209
  %v2218 = vrsqrt.pop %v2210
  %v2219 = vrsqrt.pop %v2211
  %v2220 = vrsqrt.pop %v2212
  %v2221 = vrsqrt.pop %v2213
  %v2222 = vmul.f32 %v2158, %v2214
  %v2223 = vmul.f32 %v2159, %v2215
  %v2224 = vmul.f32 %v2160, %v2216
  %v2225 = vmul.f32 %v2161, %v2217
  %v2226 = vmul.f32 %v2162, %v2218
  %v2227 = vmul.f32 %v2163, %v2219
  %v2228 = vmul.f32 %v2164, %v2220
  %v2229 = vmul.f32 %v2165, %v2221
  %v2230 = vld [vmem:[%s10] sm:$0x1]
  %v2232 = vlaneseq
  %v2233 = vshrl.u32 %v2232, 7
  %v2234 = vsub.s32 0, %v2233
  %v2235 = vrot.slane %v2230, %v2234
  %v2237 = vmul.f32 %v2222, %v2235
  %v2238 = vmul.f32 %v2223, %v2235
  %v2239 = vmul.f32 %v2224, %v2235
  %v2240 = vmul.f32 %v2225, %v2235
  %v2241 = vmul.f32 %v2226, %v2235
  %v2242 = vmul.f32 %v2227, %v2235
  %v2243 = vmul.f32 %v2228, %v2235
  %v2244 = vmul.f32 %v2229, %v2235
  %v2245 = vld [vmem:[%s11] sm:$0x1]
  %v2247 = vlaneseq
  %v2248 = vshrl.u32 %v2247, 7
  %v2249 = vsub.s32 0, %v2248
  %v2250 = vrot.slane %v2245, %v2249
  %v2252 = vadd.f32 %v2237, %v2250
  %v2253 = vadd.f32 %v2238, %v2250
  %v2254 = vadd.f32 %v2239, %v2250
  %v2255 = vadd.f32 %v2240, %v2250
  %v2256 = vadd.f32 %v2241, %v2250
  %v2257 = vadd.f32 %v2242, %v2250
  %v2258 = vadd.f32 %v2243, %v2250
  %v2259 = vadd.f32 %v2244, %v2250
  %2260 = vst.msk [vmem:[%s12] sm:$0xff] %vm53, %v2252
  %2261 = vst.msk [vmem:[%s12 + $0x8] sm:$0xff] %vm53, %v2253
  %2262 = vst.msk [vmem:[%s12 + $0x10] sm:$0xff] %vm53, %v2254
  %2263 = vst.msk [vmem:[%s12 + $0x18] sm:$0xff] %vm53, %v2255
  %2264 = vst.msk [vmem:[%s12 + $0x20] sm:$0xff] %vm53, %v2256
  %2265 = vst.msk [vmem:[%s12 + $0x28] sm:$0xff] %vm53, %v2257
  %2266 = vst.msk [vmem:[%s12 + $0x30] sm:$0xff] %vm53, %v2258
  %2267 = vst.msk [vmem:[%s12 + $0x38] sm:$0xff] %vm53, %v2259
  // Predicated region
  $region50: #{tpu_custom_call.1} parent=0 // pred_check
    _
  $region51: #{tpu_custom_call.1} parent=0 // pred_check_branch
    %2269 = sbr.rel (0) target = $region53
  $region52: #{tpu_custom_call.1} parent=0 // pred_region
    _
  $region53: #{tpu_custom_call.1} parent=0 // pred_fallthru
    _
  // Predicated region
  $region54: #{tpu_custom_call.1} parent=0 // pred_check
    _
  $region55: #{tpu_custom_call.1} parent=0 // pred_check_branch
    %2271 = sbr.rel (0) target = $region57
  $region56: #{tpu_custom_call.1} parent=0 // pred_region
    _
  $region57: #{tpu_custom_call.1} parent=0 // pred_fallthru
    _

</llo_original>
